<compile_context>
chip_gen: v7x
topology: tpu7x:2x2x1
jax: 0.10.0
libtpu: 0.0.40
codegen_flags: <defaults>
</compile_context>

<pallas_src>
import functools

import jax
import jax.numpy as jnp
from jax.experimental import pallas as pl
from jax.experimental.pallas import tpu as pltpu


# --------------------------- static layer layout ----------------------------

# (in_features, out_features) per layer: fc1..fc5, out   (matches the PyTorch Net)
_DIMS = [(15, 32), (32, 32), (32, 64), (64, 32), (32, 16), (16, 3)]
_NAMES = ["1", "2", "3", "4", "5", "o"]

# Row offsets of each (out, in) weight inside the packed weight slab.
_ROW_OFF = [0, 32, 64, 128, 160, 176]
_W_ROWS, _W_COLS = 192, 64          # slab is (192, 64) f32  (~48 KiB)
_B_ROWS, _B_COLS = 64, 8            # bias slab: column j holds bias of layer j


# ----------------------------- kernel helpers -------------------------------

def _elu(x):
    # F.elu, alpha=1.0.  exp is taken on min(x, 0) so the unselected branch of
    # the where never sees inf; exp lowers to the EUP (free slot vs VALU).
    return jnp.where(x > 0, x, jnp.exp(jnp.minimum(x, 0.0)) - 1.0)


def _normalize(t, eps=1e-5):
    # LayerNorm over the feature axis (axis 0 in feature-major layout).
    # The affine (gamma, beta) has been folded into the following Linear.
    mu = jnp.mean(t, axis=0, keepdims=True)
    tc = t - mu
    var = jnp.mean(tc * tc, axis=0, keepdims=True)
    return tc * jax.lax.rsqrt(var + eps)


# ------------------------------- the kernel ---------------------------------

def net_kernel(x_ref, w_ref, b_ref, o_ref, *, bf16_matmul=False):
    # x_ref: (15, tb)   feature-major activation tile, batch on lanes
    # w_ref: (192, 64)  packed (out, in) weights (LN affine pre-folded)
    # b_ref: (64, 8)    packed biases, one column per layer
    # o_ref: (3, tb)
    t = x_ref[...]                                        # (15, tb) f32
    for j, ((fin, fout), off) in enumerate(zip(_DIMS, _ROW_OFF)):
        w = w_ref[off:off + fout, 0:fin]                  # (out, in), static slice
        b = b_ref[0:fout, j:j + 1]                        # (out, 1) -> lane bcast
        lhs, rhs = w, t
        if bf16_matmul:                                   # v6e/v7x option
            lhs = lhs.astype(jnp.bfloat16)
            rhs = rhs.astype(jnp.bfloat16)
        t = jnp.dot(lhs, rhs, preferred_element_type=jnp.float32) + b
        if j < 5:                                         # no act/LN after `out`
            t = _elu(t)
            t = _normalize(t)
    o_ref[...] = t.astype(o_ref.dtype)


# ---------------------------- parameter packing ------------------------------

def pack_params(p):
    """Fold LayerNorm affine into the following Linear and pack everything into
    two small slabs.  Weights are PyTorch-layout (out, in)."""
    w_slab = jnp.zeros((_W_ROWS, _W_COLS), jnp.float32)
    b_slab = jnp.zeros((_B_ROWS, _B_COLS), jnp.float32)
    prev_ln = None                                        # (gamma, beta) of LN before this layer
    for j, (nm, (fin, fout), off) in enumerate(zip(_NAMES, _DIMS, _ROW_OFF)):
        w = p[f"w{nm}"]                                   # (out, in)
        b = p[f"b{nm}"]                                   # (out,)
        if prev_ln is not None:
            g, be = prev_ln
            b = b + w @ be                                # b' = W @ beta + b
            w = w * g[None, :]                            # W' = W * gamma (per input col)
        w_slab = w_slab.at[off:off + fout, 0:fin].set(w)
        b_slab = b_slab.at[0:fout, j].set(b)
        prev_ln = (p[f"g{nm}"], p[f"be{nm}"]) if nm != "o" else None
    return w_slab, b_slab


# --------------------------------- wrapper -----------------------------------

@functools.partial(jax.jit, static_argnames=("batch_tile", "bf16_matmul"))
def _net_forward_impl(x, params, batch_tile, bf16_matmul):
    n, fin = x.shape
    tb = int(batch_tile)

    n_pad = pl.cdiv(n, tb) * tb
    # Feature-major, lane-dense layout: (15, n_pad) with batch on lanes.
    xt = jnp.zeros((fin, n_pad), jnp.float32).at[:, :n].set(x.T)

    w_slab, b_slab = pack_params(params)

    flops = 2 * n_pad * sum(i * o for i, o in _DIMS)
    transcendentals = n_pad * sum(o for _, o in _DIMS[:5])          # one exp per ELU elem
    bytes_accessed = 4 * (fin * n_pad + 3 * n_pad
                          + _W_ROWS * _W_COLS + _B_ROWS * _B_COLS)

    out_t = pl.pallas_call(
        functools.partial(net_kernel, bf16_matmul=bf16_matmul),
        out_shape=jax.ShapeDtypeStruct((3, n_pad), jnp.float32),
        grid=(n_pad // tb,),
        in_specs=[
            pl.BlockSpec((fin, tb), lambda i: (0, i)),               # activations tile
            pl.BlockSpec((_W_ROWS, _W_COLS), lambda i: (0, 0)),      # weight slab (resident)
            pl.BlockSpec((_B_ROWS, _B_COLS), lambda i: (0, 0)),      # bias slab (resident)
        ],
        out_specs=pl.BlockSpec((3, tb), lambda i: (0, i)),
        compiler_params=pltpu.CompilerParams(
            dimension_semantics=("parallel",),
        ),
        cost_estimate=pl.CostEstimate(
            flops=int(flops),
            transcendentals=int(transcendentals),
            bytes_accessed=int(bytes_accessed),
        ),
    )(xt, w_slab, b_slab)

    # Back to PyTorch (N, 3) layout; drop batch padding.
    return out_t[:, :n].T


def net_forward(x, params, *, batch_tile=512, bf16_matmul=False):
    """x: (N, 15) float32 (PyTorch layout).  Returns (N, 3) float32."""
    n, fin = x.shape
    assert fin == 15, "Net expects 15 input features"
    assert batch_tile >= 128 and batch_tile % 128 == 0, \
        "batch_tile must be a multiple of 128"
    # Clamp the tile so tiny batches don't over-pad (still a multiple of 128).
    tb = min(int(batch_tile), pl.cdiv(n, 128) * 128)
    return _net_forward_impl(x, params, tb, bool(bf16_matmul))


# ------------------------------ parameter init -------------------------------

def init_params(key):
    """Deterministic init.  Weights are PyTorch-layout (out, in); LayerNorm
    gamma/beta are random (non-default) so the affine-folding path is exercised."""
    params = {}
    for (fin, fout), nm in zip(_DIMS, _NAMES):
        key, kw, kb = jax.random.split(key, 3)
        bound = 1.0 / jnp.sqrt(jnp.float32(fin))
        params[f"w{nm}"] = jax.random.uniform(
            kw, (fout, fin), jnp.float32, minval=-bound, maxval=bound)
        params[f"b{nm}"] = jax.random.uniform(
            kb, (fout,), jnp.float32, minval=-bound, maxval=bound)
    ln_dims = {"1": 32, "2": 32, "3": 64, "4": 32, "5": 16}
    for nm, d in ln_dims.items():
        key, kg, kb = jax.random.split(key, 3)
        params[f"g{nm}"] = jax.random.uniform(kg, (d,), jnp.float32, 0.5, 1.5)
        params[f"be{nm}"] = 0.1 * jax.random.normal(kb, (d,), jnp.float32)
    return params


# ---------------------------- pure-JAX reference ------------------------------

def net_ref(x, p):
    """Mirrors the PyTorch forward exactly (batch-major, explicit affine LN)."""
    t = x
    for nm in ["1", "2", "3", "4", "5"]:
        t = t @ p[f"w{nm}"].T + p[f"b{nm}"]
        t = jnp.where(t > 0, t, jnp.expm1(t))
        mu = jnp.mean(t, -1, keepdims=True)
        var = jnp.mean((t - mu) ** 2, -1, keepdims=True)
        t = (t - mu) / jnp.sqrt(var + 1e-5) * p[f"g{nm}"] + p[f"be{nm}"]
    return t @ p["wo"].T + p["bo"]


# ----------------------------------- main -------------------------------------

if __name__ == "__main__":
    key = jax.random.PRNGKey(0)
    kp, kx, kx2 = jax.random.split(key, 3)

    params = init_params(kp)

    # Lane-aligned batch: single 256-lane tile (clamped from the 512 default).
    batch = 256
    x = jax.random.normal(kx, (batch, 15), jnp.float32)
    out = jax.block_until_ready(net_forward(x, params))
    ref = net_ref(x, params)
    assert out.shape == (batch, 3)
    assert jnp.allclose(out, ref, atol=1e-4, rtol=1e-4), "mismatch vs JAX reference"

    # Ragged batch exercises the pad-to-128 / slice-back path.
    x2 = jax.random.normal(kx2, (50, 15), jnp.float32)
    out2 = jax.block_until_ready(net_forward(x2, params))
    assert jnp.allclose(out2, net_ref(x2, params), atol=1e-4, rtol=1e-4), \
        "mismatch vs JAX reference (padded batch)"

    # Multi-tile batch exercises the batch grid ("parallel" axis).
    x3 = jax.random.normal(kx, (1536, 15), jnp.float32)
    out3 = jax.block_until_ready(net_forward(x3, params, batch_tile=512))
    assert jnp.allclose(out3, net_ref(x3, params), atol=1e-4, rtol=1e-4), \
        "mismatch vs JAX reference (multi-tile batch)"

    print("KERNEL_OK")
</pallas_src>

<mosaic_0001>
module attributes {stable_mosaic.version = 11 : i64} {
  func.func @net_kernel(%arg0: i32, %arg1: memref<15x256xf32, #tpu.memory_space<vmem>>, %arg2: memref<192x64xf32, #tpu.memory_space<vmem>>, %arg3: memref<64x8xf32, #tpu.memory_space<vmem>>, %arg4: memref<3x256xf32, #tpu.memory_space<vmem>>) attributes {dimension_semantics = [#tpu.dimension_semantics<parallel>], iteration_bounds = array<i64: 1>, scalar_prefetch = 0 : i64, scratch_operands = 0 : i64, tpu.core_type = #tpu.core_type<tc>, window_params = [{transform_indices = @transform_0, window_bounds = array<i64: 15, 256>}, {pipeline_mode = #tpu.pipeline_mode<synchronous>, transform_indices = @transform_1, window_bounds = array<i64: 192, 64>}, {pipeline_mode = #tpu.pipeline_mode<synchronous>, transform_indices = @transform_2, window_bounds = array<i64: 64, 8>}, {transform_indices = @transform_3, window_bounds = array<i64: 3, 256>}]} {
    %c0 = arith.constant 0 : index
    %c0_0 = arith.constant 0 : index
    %0 = vector.load %arg1[%c0, %c0_0] : memref<15x256xf32, #tpu.memory_space<vmem>>, vector<15x256xf32>
    %c0_1 = arith.constant 0 : index
    %c0_2 = arith.constant 0 : index
    %1 = vector.load %arg2[%c0_1, %c0_2] : memref<192x64xf32, #tpu.memory_space<vmem>>, vector<32x15xf32>
    %c0_3 = arith.constant 0 : index
    %c0_4 = arith.constant 0 : index
    %2 = vector.load %arg3[%c0_3, %c0_4] : memref<64x8xf32, #tpu.memory_space<vmem>>, vector<32x1xf32>
    %cst = arith.constant dense<0.000000e+00> : vector<32x256xf32>
    %3 = tpu.matmul %1, %0, %cst {dimension_numbers = #tpu.dot_dimension_numbers<[1], [0], [0], [1], [0, 0, 1, 1], [], []>} : vector<32x15xf32>, vector<15x256xf32>, vector<32x256xf32> -> vector<32x256xf32>
    %4 = vector.broadcast %2 : vector<32x1xf32> to vector<32x256xf32>
    %5 = arith.addf %3, %4 : vector<32x256xf32>
    %cst_5 = arith.constant 0.000000e+00 : f32
    %6 = vector.broadcast %cst_5 : f32 to vector<32x256xf32>
    %7 = arith.cmpf ogt, %5, %6 : vector<32x256xf32>
    %cst_6 = arith.constant 0.000000e+00 : f32
    %8 = vector.broadcast %cst_6 : f32 to vector<32x256xf32>
    %9 = arith.minimumf %5, %8 : vector<32x256xf32>
    %10 = math.exp %9 : vector<32x256xf32>
    %cst_7 = arith.constant 1.000000e+00 : f32
    %11 = vector.broadcast %cst_7 : f32 to vector<32x256xf32>
    %12 = arith.subf %10, %11 : vector<32x256xf32>
    %13 = arith.select %7, %5, %12 : vector<32x256xi1>, vector<32x256xf32>
    %cst_8 = arith.constant dense<0.000000e+00> : vector<256xf32>
    %14 = vector.multi_reduction <add>, %13, %cst_8 [0] : vector<32x256xf32> to vector<256xf32>
    %15 = vector.shape_cast %14 : vector<256xf32> to vector<1x256xf32>
    %cst_9 = arith.constant 3.200000e+01 : f32
    %16 = vector.broadcast %cst_9 : f32 to vector<1x256xf32>
    %17 = arith.divf %15, %16 : vector<1x256xf32>
    %18 = vector.broadcast %17 : vector<1x256xf32> to vector<32x256xf32>
    %19 = arith.subf %13, %18 : vector<32x256xf32>
    %20 = arith.mulf %19, %19 : vector<32x256xf32>
    %cst_10 = arith.constant dense<0.000000e+00> : vector<256xf32>
    %21 = vector.multi_reduction <add>, %20, %cst_10 [0] : vector<32x256xf32> to vector<256xf32>
    %22 = vector.shape_cast %21 : vector<256xf32> to vector<1x256xf32>
    %cst_11 = arith.constant 3.200000e+01 : f32
    %23 = vector.broadcast %cst_11 : f32 to vector<1x256xf32>
    %24 = arith.divf %22, %23 : vector<1x256xf32>
    %cst_12 = arith.constant 9.99999974E-6 : f32
    %25 = vector.broadcast %cst_12 : f32 to vector<1x256xf32>
    %26 = arith.addf %24, %25 : vector<1x256xf32>
    %27 = math.rsqrt %26 : vector<1x256xf32>
    %28 = vector.broadcast %27 : vector<1x256xf32> to vector<32x256xf32>
    %29 = arith.mulf %19, %28 : vector<32x256xf32>
    %c32 = arith.constant 32 : index
    %c0_13 = arith.constant 0 : index
    %30 = vector.load %arg2[%c32, %c0_13] : memref<192x64xf32, #tpu.memory_space<vmem>>, vector<32x32xf32>
    %c0_14 = arith.constant 0 : index
    %c1 = arith.constant 1 : index
    %31 = vector.load %arg3[%c0_14, %c1] : memref<64x8xf32, #tpu.memory_space<vmem>>, vector<32x1xf32>
    %cst_15 = arith.constant dense<0.000000e+00> : vector<32x256xf32>
    %32 = tpu.matmul %30, %29, %cst_15 {dimension_numbers = #tpu.dot_dimension_numbers<[1], [0], [0], [1], [0, 0, 1, 1], [], []>} : vector<32x32xf32>, vector<32x256xf32>, vector<32x256xf32> -> vector<32x256xf32>
    %33 = vector.broadcast %31 : vector<32x1xf32> to vector<32x256xf32>
    %34 = arith.addf %32, %33 : vector<32x256xf32>
    %cst_16 = arith.constant 0.000000e+00 : f32
    %35 = vector.broadcast %cst_16 : f32 to vector<32x256xf32>
    %36 = arith.cmpf ogt, %34, %35 : vector<32x256xf32>
    %cst_17 = arith.constant 0.000000e+00 : f32
    %37 = vector.broadcast %cst_17 : f32 to vector<32x256xf32>
    %38 = arith.minimumf %34, %37 : vector<32x256xf32>
    %39 = math.exp %38 : vector<32x256xf32>
    %cst_18 = arith.constant 1.000000e+00 : f32
    %40 = vector.broadcast %cst_18 : f32 to vector<32x256xf32>
    %41 = arith.subf %39, %40 : vector<32x256xf32>
    %42 = arith.select %36, %34, %41 : vector<32x256xi1>, vector<32x256xf32>
    %cst_19 = arith.constant dense<0.000000e+00> : vector<256xf32>
    %43 = vector.multi_reduction <add>, %42, %cst_19 [0] : vector<32x256xf32> to vector<256xf32>
    %44 = vector.shape_cast %43 : vector<256xf32> to vector<1x256xf32>
    %cst_20 = arith.constant 3.200000e+01 : f32
    %45 = vector.broadcast %cst_20 : f32 to vector<1x256xf32>
    %46 = arith.divf %44, %45 : vector<1x256xf32>
    %47 = vector.broadcast %46 : vector<1x256xf32> to vector<32x256xf32>
    %48 = arith.subf %42, %47 : vector<32x256xf32>
    %49 = arith.mulf %48, %48 : vector<32x256xf32>
    %cst_21 = arith.constant dense<0.000000e+00> : vector<256xf32>
    %50 = vector.multi_reduction <add>, %49, %cst_21 [0] : vector<32x256xf32> to vector<256xf32>
    %51 = vector.shape_cast %50 : vector<256xf32> to vector<1x256xf32>
    %cst_22 = arith.constant 3.200000e+01 : f32
    %52 = vector.broadcast %cst_22 : f32 to vector<1x256xf32>
    %53 = arith.divf %51, %52 : vector<1x256xf32>
    %cst_23 = arith.constant 9.99999974E-6 : f32
    %54 = vector.broadcast %cst_23 : f32 to vector<1x256xf32>
    %55 = arith.addf %53, %54 : vector<1x256xf32>
    %56 = math.rsqrt %55 : vector<1x256xf32>
    %57 = vector.broadcast %56 : vector<1x256xf32> to vector<32x256xf32>
    %58 = arith.mulf %48, %57 : vector<32x256xf32>
    %c64 = arith.constant 64 : index
    %c0_24 = arith.constant 0 : index
    %59 = vector.load %arg2[%c64, %c0_24] : memref<192x64xf32, #tpu.memory_space<vmem>>, vector<64x32xf32>
    %c0_25 = arith.constant 0 : index
    %c2 = arith.constant 2 : index
    %60 = vector.load %arg3[%c0_25, %c2] : memref<64x8xf32, #tpu.memory_space<vmem>>, vector<64x1xf32>
    %cst_26 = arith.constant dense<0.000000e+00> : vector<64x256xf32>
    %61 = tpu.matmul %59, %58, %cst_26 {dimension_numbers = #tpu.dot_dimension_numbers<[1], [0], [0], [1], [0, 0, 1, 1], [], []>} : vector<64x32xf32>, vector<32x256xf32>, vector<64x256xf32> -> vector<64x256xf32>
    %62 = vector.broadcast %60 : vector<64x1xf32> to vector<64x256xf32>
    %63 = arith.addf %61, %62 : vector<64x256xf32>
    %cst_27 = arith.constant 0.000000e+00 : f32
    %64 = vector.broadcast %cst_27 : f32 to vector<64x256xf32>
    %65 = arith.cmpf ogt, %63, %64 : vector<64x256xf32>
    %cst_28 = arith.constant 0.000000e+00 : f32
    %66 = vector.broadcast %cst_28 : f32 to vector<64x256xf32>
    %67 = arith.minimumf %63, %66 : vector<64x256xf32>
    %68 = math.exp %67 : vector<64x256xf32>
    %cst_29 = arith.constant 1.000000e+00 : f32
    %69 = vector.broadcast %cst_29 : f32 to vector<64x256xf32>
    %70 = arith.subf %68, %69 : vector<64x256xf32>
    %71 = arith.select %65, %63, %70 : vector<64x256xi1>, vector<64x256xf32>
    %cst_30 = arith.constant dense<0.000000e+00> : vector<256xf32>
    %72 = vector.multi_reduction <add>, %71, %cst_30 [0] : vector<64x256xf32> to vector<256xf32>
    %73 = vector.shape_cast %72 : vector<256xf32> to vector<1x256xf32>
    %cst_31 = arith.constant 6.400000e+01 : f32
    %74 = vector.broadcast %cst_31 : f32 to vector<1x256xf32>
    %75 = arith.divf %73, %74 : vector<1x256xf32>
    %76 = vector.broadcast %75 : vector<1x256xf32> to vector<64x256xf32>
    %77 = arith.subf %71, %76 : vector<64x256xf32>
    %78 = arith.mulf %77, %77 : vector<64x256xf32>
    %cst_32 = arith.constant dense<0.000000e+00> : vector<256xf32>
    %79 = vector.multi_reduction <add>, %78, %cst_32 [0] : vector<64x256xf32> to vector<256xf32>
    %80 = vector.shape_cast %79 : vector<256xf32> to vector<1x256xf32>
    %cst_33 = arith.constant 6.400000e+01 : f32
    %81 = vector.broadcast %cst_33 : f32 to vector<1x256xf32>
    %82 = arith.divf %80, %81 : vector<1x256xf32>
    %cst_34 = arith.constant 9.99999974E-6 : f32
    %83 = vector.broadcast %cst_34 : f32 to vector<1x256xf32>
    %84 = arith.addf %82, %83 : vector<1x256xf32>
    %85 = math.rsqrt %84 : vector<1x256xf32>
    %86 = vector.broadcast %85 : vector<1x256xf32> to vector<64x256xf32>
    %87 = arith.mulf %77, %86 : vector<64x256xf32>
    %c128 = arith.constant 128 : index
    %c0_35 = arith.constant 0 : index
    %88 = vector.load %arg2[%c128, %c0_35] : memref<192x64xf32, #tpu.memory_space<vmem>>, vector<32x64xf32>
    %c0_36 = arith.constant 0 : index
    %c3 = arith.constant 3 : index
    %89 = vector.load %arg3[%c0_36, %c3] : memref<64x8xf32, #tpu.memory_space<vmem>>, vector<32x1xf32>
    %cst_37 = arith.constant dense<0.000000e+00> : vector<32x256xf32>
    %90 = tpu.matmul %88, %87, %cst_37 {dimension_numbers = #tpu.dot_dimension_numbers<[1], [0], [0], [1], [0, 0, 1, 1], [], []>} : vector<32x64xf32>, vector<64x256xf32>, vector<32x256xf32> -> vector<32x256xf32>
    %91 = vector.broadcast %89 : vector<32x1xf32> to vector<32x256xf32>
    %92 = arith.addf %90, %91 : vector<32x256xf32>
    %cst_38 = arith.constant 0.000000e+00 : f32
    %93 = vector.broadcast %cst_38 : f32 to vector<32x256xf32>
    %94 = arith.cmpf ogt, %92, %93 : vector<32x256xf32>
    %cst_39 = arith.constant 0.000000e+00 : f32
    %95 = vector.broadcast %cst_39 : f32 to vector<32x256xf32>
    %96 = arith.minimumf %92, %95 : vector<32x256xf32>
    %97 = math.exp %96 : vector<32x256xf32>
    %cst_40 = arith.constant 1.000000e+00 : f32
    %98 = vector.broadcast %cst_40 : f32 to vector<32x256xf32>
    %99 = arith.subf %97, %98 : vector<32x256xf32>
    %100 = arith.select %94, %92, %99 : vector<32x256xi1>, vector<32x256xf32>
    %cst_41 = arith.constant dense<0.000000e+00> : vector<256xf32>
    %101 = vector.multi_reduction <add>, %100, %cst_41 [0] : vector<32x256xf32> to vector<256xf32>
    %102 = vector.shape_cast %101 : vector<256xf32> to vector<1x256xf32>
    %cst_42 = arith.constant 3.200000e+01 : f32
    %103 = vector.broadcast %cst_42 : f32 to vector<1x256xf32>
    %104 = arith.divf %102, %103 : vector<1x256xf32>
    %105 = vector.broadcast %104 : vector<1x256xf32> to vector<32x256xf32>
    %106 = arith.subf %100, %105 : vector<32x256xf32>
    %107 = arith.mulf %106, %106 : vector<32x256xf32>
    %cst_43 = arith.constant dense<0.000000e+00> : vector<256xf32>
    %108 = vector.multi_reduction <add>, %107, %cst_43 [0] : vector<32x256xf32> to vector<256xf32>
    %109 = vector.shape_cast %108 : vector<256xf32> to vector<1x256xf32>
    %cst_44 = arith.constant 3.200000e+01 : f32
    %110 = vector.broadcast %cst_44 : f32 to vector<1x256xf32>
    %111 = arith.divf %109, %110 : vector<1x256xf32>
    %cst_45 = arith.constant 9.99999974E-6 : f32
    %112 = vector.broadcast %cst_45 : f32 to vector<1x256xf32>
    %113 = arith.addf %111, %112 : vector<1x256xf32>
    %114 = math.rsqrt %113 : vector<1x256xf32>
    %115 = vector.broadcast %114 : vector<1x256xf32> to vector<32x256xf32>
    %116 = arith.mulf %106, %115 : vector<32x256xf32>
    %c160 = arith.constant 160 : index
    %c0_46 = arith.constant 0 : index
    %117 = vector.load %arg2[%c160, %c0_46] : memref<192x64xf32, #tpu.memory_space<vmem>>, vector<16x32xf32>
    %c0_47 = arith.constant 0 : index
    %c4 = arith.constant 4 : index
    %118 = vector.load %arg3[%c0_47, %c4] : memref<64x8xf32, #tpu.memory_space<vmem>>, vector<16x1xf32>
    %cst_48 = arith.constant dense<0.000000e+00> : vector<16x256xf32>
    %119 = tpu.matmul %117, %116, %cst_48 {dimension_numbers = #tpu.dot_dimension_numbers<[1], [0], [0], [1], [0, 0, 1, 1], [], []>} : vector<16x32xf32>, vector<32x256xf32>, vector<16x256xf32> -> vector<16x256xf32>
    %120 = vector.broadcast %118 : vector<16x1xf32> to vector<16x256xf32>
    %121 = arith.addf %119, %120 : vector<16x256xf32>
    %cst_49 = arith.constant 0.000000e+00 : f32
    %122 = vector.broadcast %cst_49 : f32 to vector<16x256xf32>
    %123 = arith.cmpf ogt, %121, %122 : vector<16x256xf32>
    %cst_50 = arith.constant 0.000000e+00 : f32
    %124 = vector.broadcast %cst_50 : f32 to vector<16x256xf32>
    %125 = arith.minimumf %121, %124 : vector<16x256xf32>
    %126 = math.exp %125 : vector<16x256xf32>
    %cst_51 = arith.constant 1.000000e+00 : f32
    %127 = vector.broadcast %cst_51 : f32 to vector<16x256xf32>
    %128 = arith.subf %126, %127 : vector<16x256xf32>
    %129 = arith.select %123, %121, %128 : vector<16x256xi1>, vector<16x256xf32>
    %cst_52 = arith.constant dense<0.000000e+00> : vector<256xf32>
    %130 = vector.multi_reduction <add>, %129, %cst_52 [0] : vector<16x256xf32> to vector<256xf32>
    %131 = vector.shape_cast %130 : vector<256xf32> to vector<1x256xf32>
    %cst_53 = arith.constant 1.600000e+01 : f32
    %132 = vector.broadcast %cst_53 : f32 to vector<1x256xf32>
    %133 = arith.divf %131, %132 : vector<1x256xf32>
    %134 = vector.broadcast %133 : vector<1x256xf32> to vector<16x256xf32>
    %135 = arith.subf %129, %134 : vector<16x256xf32>
    %136 = arith.mulf %135, %135 : vector<16x256xf32>
    %cst_54 = arith.constant dense<0.000000e+00> : vector<256xf32>
    %137 = vector.multi_reduction <add>, %136, %cst_54 [0] : vector<16x256xf32> to vector<256xf32>
    %138 = vector.shape_cast %137 : vector<256xf32> to vector<1x256xf32>
    %cst_55 = arith.constant 1.600000e+01 : f32
    %139 = vector.broadcast %cst_55 : f32 to vector<1x256xf32>
    %140 = arith.divf %138, %139 : vector<1x256xf32>
    %cst_56 = arith.constant 9.99999974E-6 : f32
    %141 = vector.broadcast %cst_56 : f32 to vector<1x256xf32>
    %142 = arith.addf %140, %141 : vector<1x256xf32>
    %143 = math.rsqrt %142 : vector<1x256xf32>
    %144 = vector.broadcast %143 : vector<1x256xf32> to vector<16x256xf32>
    %145 = arith.mulf %135, %144 : vector<16x256xf32>
    %c176 = arith.constant 176 : index
    %c0_57 = arith.constant 0 : index
    %146 = vector.load %arg2[%c176, %c0_57] : memref<192x64xf32, #tpu.memory_space<vmem>>, vector<3x16xf32>
    %c0_58 = arith.constant 0 : index
    %c5 = arith.constant 5 : index
    %147 = vector.load %arg3[%c0_58, %c5] : memref<64x8xf32, #tpu.memory_space<vmem>>, vector<3x1xf32>
    %cst_59 = arith.constant dense<0.000000e+00> : vector<3x256xf32>
    %148 = tpu.matmul %146, %145, %cst_59 {dimension_numbers = #tpu.dot_dimension_numbers<[1], [0], [0], [1], [0, 0, 1, 1], [], []>} : vector<3x16xf32>, vector<16x256xf32>, vector<3x256xf32> -> vector<3x256xf32>
    %149 = vector.broadcast %147 : vector<3x1xf32> to vector<3x256xf32>
    %150 = arith.addf %148, %149 : vector<3x256xf32>
    %c0_60 = arith.constant 0 : index
    %c0_61 = arith.constant 0 : index
    %151 = vector.load %arg4[%c0_60, %c0_61] : memref<3x256xf32, #tpu.memory_space<vmem>>, vector<3x256xf32>
    tpu.vector_store %arg4[%c0_60, %c0_61], %150 {strides = array<i32>} : memref<3x256xf32, #tpu.memory_space<vmem>>, vector<3x256xf32>,
    return
  }
  func.func @transform_0(%arg0: i32) -> (i32, i32) {
    %c0_i32 = arith.constant 0 : i32
    %c0_i32_0 = arith.constant 0 : i32
    return %c0_i32, %arg0 : i32, i32
  }
  func.func @transform_1(%arg0: i32) -> (i32, i32) {
    %c0_i32 = arith.constant 0 : i32
    %c0_i32_0 = arith.constant 0 : i32
    %c0_i32_1 = arith.constant 0 : i32
    return %c0_i32, %c0_i32_0 : i32, i32
  }
  func.func @transform_2(%arg0: i32) -> (i32, i32) {
    %c0_i32 = arith.constant 0 : i32
    %c0_i32_0 = arith.constant 0 : i32
    %c0_i32_1 = arith.constant 0 : i32
    return %c0_i32, %c0_i32_0 : i32, i32
  }
  func.func @transform_3(%arg0: i32) -> (i32, i32) {
    %c0_i32 = arith.constant 0 : i32
    %c0_i32_0 = arith.constant 0 : i32
    return %c0_i32, %arg0 : i32, i32
  }
}

</mosaic_0001>

<llo_original>
// kernel: _net_forward_impl.1
$region0: #{_net_forward_impl.1}
  #allocation0 [shape = 'u32[]', space=smem, size = 0x4, offset = 0x4, fixed_abs, tag = 'smem constant byte address 0x4 - core index']
  #allocation1 [shape = 'u32[144,128]{1,0:T(1,128)}', space=vmem, size = 0x12000, scoped, tag = 'internal scratch']
  %s0 = inlined_call_operand.vmem [shape: f32[15,256], index: 0, kind: input, shape index: {}]
  %s1 = inlined_call_operand.vmem [shape: f32[192,64], index: 1, kind: input, shape index: {}]
  %s2 = inlined_call_operand.vmem [shape: f32[64,8], index: 2, kind: input, shape index: {}]
  %s3 = inlined_call_operand.hbm [shape: f32[3,256], index: 3, kind: output, shape index: {}]
  %s4 = sld [smem:[#allocation0]]
  $region22: #{_net_forward_impl.1} parent=0
    _
  %s6 = ssub.s32 1, %s4
  %s7 = scalar_select 0, %s6, %s4
  $region1: #{_net_forward_impl.1} parent=0
    #allocation2 [shape = 'u8[4096]{0}', space=vmem, size = 0x1000, scoped, tag = 'output window, operand 0, single buffered']
    #allocation3 [shape = 's32[1]{0}', space=sflag, size = 0x4, scoped, tag = 'scoped memory for _net_forward_impl.1']
    %8 = vsyncpa [#allocation3], 0
    // Predicated region
    $region2: #{_net_forward_impl.1} parent=1 // pred_check
      _
    $region3: #{_net_forward_impl.1} parent=1 // pred_check_branch
      %10 = sbr.rel (0) target = $region5
    $region4: #{_net_forward_impl.1} parent=1 // pred_region
      _
    $region5: #{_net_forward_impl.1} parent=1 // pred_fallthru
      _
    // Predicated region
    $region6: #{_net_forward_impl.1} parent=1 // pred_check
      _
    $region7: #{_net_forward_impl.1} parent=1 // pred_check_branch
      %12 = sbr.rel (0) target = $region9
    $region8: #{_net_forward_impl.1} parent=1 // pred_region
      _
    $region9: #{_net_forward_impl.1} parent=1 // pred_fallthru
      _
    // Predicated region
    $region10: #{_net_forward_impl.1} parent=1 // pred_check
      _
    $region11: #{_net_forward_impl.1} parent=1 // pred_check_branch
      %14 = sbr.rel (0) target = $region13
    $region12: #{_net_forward_impl.1} parent=1 // pred_region
      _
    $region13: #{_net_forward_impl.1} parent=1 // pred_fallthru
      _
    %v15 = vld [vmem:[%s0] sm:$0xff]
    %v16 = vld [vmem:[%s0 + $0x8] sm:$0xff]
    %v17 = vld [vmem:[%s0 + $0x10] sm:$0x7f]
    %v18 = vld [vmem:[%s0 + $0x18] sm:$0x7f]
    %v19 = vld [vmem:[%s1] sm:$0xff]
    %v20 = vld [vmem:[%s1 + $0x8] sm:$0xff]
    %v21 = vld [vmem:[%s1 + $0x10] sm:$0xff]
    %v22 = vld [vmem:[%s1 + $0x18] sm:$0xff]
    %v23 = vld [vmem:[%s2] sm:$0xff]
    %v24 = vld [vmem:[%s2 + $0x8] sm:$0xff]
    %v25 = vld [vmem:[%s2 + $0x10] sm:$0xff]
    %v26 = vld [vmem:[%s2 + $0x18] sm:$0xff]
    %28 = vset.pattern.permute.xlu0 0
    %29 = vperm.xlu0 %28, %v23
    %v30 = vpop.permute.xlu0 %29
    %33 = vset.pattern.permute.xlu0 0
    %34 = vperm.xlu0 %33, %v24
    %v35 = vpop.permute.xlu0 %34
    %38 = vset.pattern.permute.xlu0 0
    %39 = vperm.xlu0 %38, %v25
    %v40 = vpop.permute.xlu0 %39
    %43 = vset.pattern.permute.xlu0 0
    %44 = vperm.xlu0 %43, %v26
    %v45 = vpop.permute.xlu0 %44
    %vm47 = vcmask 121856
    %v49 = vsel %vm47, %v19, 0
    %v52 = vsel %vm47, %v20, 0
    %v55 = vsel %vm47, %v21, 0
    %v58 = vsel %vm47, %v22, 0
    %vm60 = vcmask 1046528
    %v62 = vsel %vm60, %v17, 0
    %v65 = vsel %vm60, %v18, 0
    %67 = vmatprep.subr.mxu0 %v16
    %68 = vmatpush1.msra.mxu0 %v15
    %69 = vmatprep.subr.mxu0 %v65
    %70 = vmatpush1.msra.mxu0 %v62
    %71 = vmatprep.subr.mxu0 0.0
    %72 = vmatpush1.msra.mxu0 0.0
    %73 = vmatprep.subr.mxu0 0.0
    %74 = vmatpush1.msra.mxu0 0.0
    %75 = vmatprep.subr.mxu0 0.0
    %76 = vmatpush1.msra.mxu0 0.0
    %77 = vmatprep.subr.mxu0 0.0
    %78 = vmatpush1.msra.mxu0 0.0
    %79 = vmatprep.subr.mxu0 0.0
    %80 = vmatpush1.msra.mxu0 0.0
    %81 = vmatprep.subr.mxu0 0.0
    %82 = vmatpush1.msra.mxu0 0.0
    %83 = vmatprep.subr.mxu0 0.0
    %84 = vmatpush1.msra.mxu0 0.0
    %85 = vmatprep.subr.mxu0 0.0
    %86 = vmatpush1.msra.mxu0 0.0
    %87 = vmatprep.subr.mxu0 0.0
    %88 = vmatpush1.msra.mxu0 0.0
    %89 = vmatprep.subr.mxu0 0.0
    %90 = vmatpush1.msra.mxu0 0.0
    %91 = vmatprep.subr.mxu0 0.0
    %92 = vmatpush1.msra.mxu0 0.0
    %93 = vmatprep.subr.mxu0 0.0
    %94 = vmatpush1.msra.mxu0 0.0
    %95 = vmatprep.subr.mxu0 0.0
    %96 = vmatpush1.msra.mxu0 0.0
    %97 = vmatprep.subr.mxu0 0.0
    %98 = vmatpush1.msra.mxu0 0.0
    %99 = vmatprep.subr.mxu0 0.0
    %100 = vmatpush1.msra.mxu0 0.0
    %101 = vmatprep.subr.mxu0 0.0
    %102 = vmatpush1.msra.mxu0 0.0
    %103 = vmatprep.subr.mxu0 0.0
    %104 = vmatpush1.msra.mxu0 0.0
    %105 = vmatprep.subr.mxu0 0.0
    %106 = vmatpush1.msra.mxu0 0.0
    %107 = vmatprep.subr.mxu0 0.0
    %108 = vmatpush1.msra.mxu0 0.0
    %109 = vmatprep.subr.mxu0 0.0
    %110 = vmatpush1.msra.mxu0 0.0
    %111 = vmatprep.subr.mxu0 0.0
    %112 = vmatpush1.msra.mxu0 0.0
    %113 = vmatprep.subr.mxu0 0.0
    %114 = vmatpush1.msra.mxu0 0.0
    %115 = vmatprep.subr.mxu0 0.0
    %116 = vmatpush1.msra.mxu0 0.0
    %117 = vmatprep.subr.mxu0 0.0
    %118 = vmatpush1.msra.mxu0 0.0
    %119 = vmatprep.subr.mxu0 0.0
    %120 = vmatpush1.msra.mxu0 0.0
    %121 = vmatprep.subr.mxu0 0.0
    %122 = vmatpush1.msra.mxu0 0.0
    %123 = vmatprep.subr.mxu0 0.0
    %124 = vmatpush1.msra.mxu0 0.0
    %125 = vmatprep.subr.mxu0 0.0
    %126 = vmatpush1.msra.mxu0 0.0
    %127 = vmatprep.subr.mxu0 0.0
    %128 = vmatpush1.msra.mxu0 0.0
    %129 = vmatprep.subr.mxu0 0.0
    %130 = vmatpush1.msra.mxu0 0.0
    %131 = vmatprep.mubr.f32.mxu0 0.0
    %132 = vmatmul.mubr.f32.gmra.mrb[0].mxu0 %v49
    %v133 = vpop.f32.mrb[0].mxu0
    %v134 = vadd.f32 %v30, %v133
    %v135 = vpop.f32.mrb[0].mxu0
    %v136 = vadd.f32 %v30, %v135
    %137 = vmatprep.mubr.f32.mxu0 0.0
    %138 = vmatmul.mubr.f32.gmra.mrb[0].mxu0 %v52
    %v139 = vpop.f32.mrb[0].mxu0
    %v140 = vadd.f32 %v35, %v139
    %v141 = vpop.f32.mrb[0].mxu0
    %v142 = vadd.f32 %v35, %v141
    %143 = vmatprep.mubr.f32.mxu0 0.0
    %144 = vmatmul.mubr.f32.gmra.mrb[0].mxu0 %v55
    %v145 = vpop.f32.mrb[0].mxu0
    %v146 = vadd.f32 %v40, %v145
    %v147 = vpop.f32.mrb[0].mxu0
    %v148 = vadd.f32 %v40, %v147
    %149 = vmatprep.mubr.f32.mxu0 0.0
    %150 = vmatmul.mubr.f32.gmra.mrb[0].mxu0 %v58
    %v151 = vpop.f32.mrb[0].mxu0
    %v152 = vadd.f32 %v45, %v151
    %v153 = vpop.f32.mrb[0].mxu0
    %v154 = vadd.f32 %v45, %v153
    %155 = vdwg.mxu0
    %vm156 = vcmp.gt.f32.partialorder %v134, 0.0
    %vm157 = vcmp.gt.f32.partialorder %v136, 0.0
    %vm158 = vcmp.gt.f32.partialorder %v140, 0.0
    %vm159 = vcmp.gt.f32.partialorder %v142, 0.0
    %vm160 = vcmp.gt.f32.partialorder %v146, 0.0
    %vm161 = vcmp.gt.f32.partialorder %v148, 0.0
    %vm162 = vcmp.gt.f32.partialorder %v152, 0.0
    %vm163 = vcmp.gt.f32.partialorder %v154, 0.0
    %v164 = vmin.f32 %v134, 0.0
    %v165 = vmin.f32 %v136, 0.0
    %v166 = vmin.f32 %v140, 0.0
    %v167 = vmin.f32 %v142, 0.0
    %v168 = vmin.f32 %v146, 0.0
    %v169 = vmin.f32 %v148, 0.0
    %v170 = vmin.f32 %v152, 0.0
    %v171 = vmin.f32 %v154, 0.0
    %v172 = vmul.f32 %v164, 1.442695
    %v173 = vpow.pop %v172
    %v174 = vmul.f32 %v165, 1.442695
    %v175 = vpow.pop %v174
    %v176 = vmul.f32 %v166, 1.442695
    %v177 = vpow.pop %v176
    %v178 = vmul.f32 %v167, 1.442695
    %v179 = vpow.pop %v178
    %v180 = vmul.f32 %v168, 1.442695
    %v181 = vpow.pop %v180
    %v182 = vmul.f32 %v169, 1.442695
    %v183 = vpow.pop %v182
    %v184 = vmul.f32 %v170, 1.442695
    %v185 = vpow.pop %v184
    %v186 = vmul.f32 %v171, 1.442695
    %v187 = vpow.pop %v186
    %v188 = vsub.f32 %v173, 1.0
    %v189 = vsub.f32 %v175, 1.0
    %v190 = vsub.f32 %v177, 1.0
    %v191 = vsub.f32 %v179, 1.0
    %v192 = vsub.f32 %v181, 1.0
    %v193 = vsub.f32 %v183, 1.0
    %v194 = vsub.f32 %v185, 1.0
    %v195 = vsub.f32 %v187, 1.0
    %v196 = vsel %vm156, %v134, %v188
    %v197 = vsel %vm157, %v136, %v189
    %v198 = vsel %vm158, %v140, %v190
    %v199 = vsel %vm159, %v142, %v191
    %v200 = vsel %vm160, %v146, %v192
    %v201 = vsel %vm161, %v148, %v193
    %v202 = vsel %vm162, %v152, %v194
    %v203 = vsel %vm163, %v154, %v195
    %v204 = vadd.f32 %v196, %v198
    %v205 = vadd.f32 %v204, %v200
    %v206 = vadd.f32 %v205, %v202
    %v207 = vrot.slane %v206, 4
    %v208 = vadd.f32 %v206, %v207
    %v209 = vrot.slane %v208, 2
    %v210 = vadd.f32 %v208, %v209
    %v211 = vrot.slane %v210, 1
    %v212 = vadd.f32 %v210, %v211
    %v213 = vadd.f32 %v197, %v199
    %v214 = vadd.f32 %v213, %v201
    %v215 = vadd.f32 %v214, %v203
    %v216 = vrot.slane %v215, 4
    %v217 = vadd.f32 %v215, %v216
    %v218 = vrot.slane %v217, 2
    %v219 = vadd.f32 %v217, %v218
    %v220 = vrot.slane %v219, 1
    %v221 = vadd.f32 %v219, %v220
    %v222 = vrcp.pop 32.0
    %v223 = vmul.f32 %v212, %v222
    %v224 = vmul.f32 %v221, %v222
    %v225 = vsub.f32 %v196, %v223
    %v226 = vsub.f32 %v197, %v224
    %v227 = vsub.f32 %v198, %v223
    %v228 = vsub.f32 %v199, %v224
    %v229 = vsub.f32 %v200, %v223
    %v230 = vsub.f32 %v201, %v224
    %v231 = vsub.f32 %v202, %v223
    %v232 = vsub.f32 %v203, %v224
    %v233 = vmul.f32 %v225, %v225
    %v234 = vmul.f32 %v226, %v226
    %v235 = vmul.f32 %v227, %v227
    %v236 = vmul.f32 %v228, %v228
    %v237 = vmul.f32 %v229, %v229
    %v238 = vmul.f32 %v230, %v230
    %v239 = vmul.f32 %v231, %v231
    %v240 = vmul.f32 %v232, %v232
    %v241 = vadd.f32 %v233, %v235
    %v242 = vadd.f32 %v241, %v237
    %v243 = vadd.f32 %v242, %v239
    %v244 = vrot.slane %v243, 4
    %v245 = vadd.f32 %v243, %v244
    %v246 = vrot.slane %v245, 2
    %v247 = vadd.f32 %v245, %v246
    %v248 = vrot.slane %v247, 1
    %v249 = vadd.f32 %v247, %v248
    %v250 = vadd.f32 %v234, %v236
    %v251 = vadd.f32 %v250, %v238
    %v252 = vadd.f32 %v251, %v240
    %v253 = vrot.slane %v252, 4
    %v254 = vadd.f32 %v252, %v253
    %v255 = vrot.slane %v254, 2
    %v256 = vadd.f32 %v254, %v255
    %v257 = vrot.slane %v256, 1
    %v258 = vadd.f32 %v256, %v257
    %v259 = vmul.f32 %v249, %v222
    %v260 = vmul.f32 %v258, %v222
    %v261 = vadd.f32 %v259, 1e-05
    %v262 = vadd.f32 %v260, 1e-05
    %v263 = vrsqrt.pop %v261
    %v264 = vrsqrt.pop %v262
    %v265 = vmul.f32 %v225, %v263
    %v266 = vmul.f32 %v226, %v264
    %v267 = vmul.f32 %v227, %v263
    %v268 = vmul.f32 %v228, %v264
    %v269 = vmul.f32 %v229, %v263
    %v270 = vmul.f32 %v230, %v264
    %v271 = vmul.f32 %v231, %v263
    %v272 = vmul.f32 %v232, %v264
    %v273 = vld [vmem:[%s1 + $0x20] sm:$0xff]
    %v274 = vld [vmem:[%s1 + $0x28] sm:$0xff]
    %v275 = vld [vmem:[%s1 + $0x30] sm:$0xff]
    %v276 = vld [vmem:[%s1 + $0x38] sm:$0xff]
    %277 = vset.pattern.permute.xlu0 1
    %278 = vperm.xlu0 %277, %v23
    %v279 = vpop.permute.xlu0 %278
    %281 = vset.pattern.permute.xlu0 1
    %282 = vperm.xlu0 %281, %v24
    %v283 = vpop.permute.xlu0 %282
    %285 = vset.pattern.permute.xlu0 1
    %286 = vperm.xlu0 %285, %v25
    %v287 = vpop.permute.xlu0 %286
    %289 = vset.pattern.permute.xlu0 1
    %290 = vperm.xlu0 %289, %v26
    %v291 = vpop.permute.xlu0 %290
    %vm293 = vcmask 261120
    %v295 = vsel %vm293, %v273, 0
    %v298 = vsel %vm293, %v274, 0
    %v301 = vsel %vm293, %v275, 0
    %v304 = vsel %vm293, %v276, 0
    %306 = vmatprep.subr.mxu0 %v266
    %307 = vmatpush1.msra.mxu0 %v265
    %308 = vmatprep.subr.mxu0 %v268
    %309 = vmatpush1.msra.mxu0 %v267
    %310 = vmatprep.subr.mxu0 %v270
    %311 = vmatpush1.msra.mxu0 %v269
    %312 = vmatprep.subr.mxu0 %v272
    %313 = vmatpush1.msra.mxu0 %v271
    %314 = vmatprep.subr.mxu0 0.0
    %315 = vmatpush1.msra.mxu0 0.0
    %316 = vmatprep.subr.mxu0 0.0
    %317 = vmatpush1.msra.mxu0 0.0
    %318 = vmatprep.subr.mxu0 0.0
    %319 = vmatpush1.msra.mxu0 0.0
    %320 = vmatprep.subr.mxu0 0.0
    %321 = vmatpush1.msra.mxu0 0.0
    %322 = vmatprep.subr.mxu0 0.0
    %323 = vmatpush1.msra.mxu0 0.0
    %324 = vmatprep.subr.mxu0 0.0
    %325 = vmatpush1.msra.mxu0 0.0
    %326 = vmatprep.subr.mxu0 0.0
    %327 = vmatpush1.msra.mxu0 0.0
    %328 = vmatprep.subr.mxu0 0.0
    %329 = vmatpush1.msra.mxu0 0.0
    %330 = vmatprep.subr.mxu0 0.0
    %331 = vmatpush1.msra.mxu0 0.0
    %332 = vmatprep.subr.mxu0 0.0
    %333 = vmatpush1.msra.mxu0 0.0
    %334 = vmatprep.subr.mxu0 0.0
    %335 = vmatpush1.msra.mxu0 0.0
    %336 = vmatprep.subr.mxu0 0.0
    %337 = vmatpush1.msra.mxu0 0.0
    %338 = vmatprep.subr.mxu0 0.0
    %339 = vmatpush1.msra.mxu0 0.0
    %340 = vmatprep.subr.mxu0 0.0
    %341 = vmatpush1.msra.mxu0 0.0
    %342 = vmatprep.subr.mxu0 0.0
    %343 = vmatpush1.msra.mxu0 0.0
    %344 = vmatprep.subr.mxu0 0.0
    %345 = vmatpush1.msra.mxu0 0.0
    %346 = vmatprep.subr.mxu0 0.0
    %347 = vmatpush1.msra.mxu0 0.0
    %348 = vmatprep.subr.mxu0 0.0
    %349 = vmatpush1.msra.mxu0 0.0
    %350 = vmatprep.subr.mxu0 0.0
    %351 = vmatpush1.msra.mxu0 0.0
    %352 = vmatprep.subr.mxu0 0.0
    %353 = vmatpush1.msra.mxu0 0.0
    %354 = vmatprep.subr.mxu0 0.0
    %355 = vmatpush1.msra.mxu0 0.0
    %356 = vmatprep.subr.mxu0 0.0
    %357 = vmatpush1.msra.mxu0 0.0
    %358 = vmatprep.subr.mxu0 0.0
    %359 = vmatpush1.msra.mxu0 0.0
    %360 = vmatprep.subr.mxu0 0.0
    %361 = vmatpush1.msra.mxu0 0.0
    %362 = vmatprep.subr.mxu0 0.0
    %363 = vmatpush1.msra.mxu0 0.0
    %364 = vmatprep.subr.mxu0 0.0
    %365 = vmatpush1.msra.mxu0 0.0
    %366 = vmatprep.subr.mxu0 0.0
    %367 = vmatpush1.msra.mxu0 0.0
    %368 = vmatprep.subr.mxu0 0.0
    %369 = vmatpush1.msra.mxu0 0.0
    %370 = vmatprep.mubr.f32.mxu0 0.0
    %371 = vmatmul.mubr.f32.gmra.mrb[0].mxu0 %v295
    %v372 = vpop.f32.mrb[0].mxu0
    %v373 = vadd.f32 %v279, %v372
    %v374 = vpop.f32.mrb[0].mxu0
    %v375 = vadd.f32 %v279, %v374
    %376 = vmatprep.mubr.f32.mxu0 0.0
    %377 = vmatmul.mubr.f32.gmra.mrb[0].mxu0 %v298
    %v378 = vpop.f32.mrb[0].mxu0
    %v379 = vadd.f32 %v283, %v378
    %v380 = vpop.f32.mrb[0].mxu0
    %v381 = vadd.f32 %v283, %v380
    %382 = vmatprep.mubr.f32.mxu0 0.0
    %383 = vmatmul.mubr.f32.gmra.mrb[0].mxu0 %v301
    %v384 = vpop.f32.mrb[0].mxu0
    %v385 = vadd.f32 %v287, %v384
    %v386 = vpop.f32.mrb[0].mxu0
    %v387 = vadd.f32 %v287, %v386
    %388 = vmatprep.mubr.f32.mxu0 0.0
    %389 = vmatmul.mubr.f32.gmra.mrb[0].mxu0 %v304
    %v390 = vpop.f32.mrb[0].mxu0
    %v391 = vadd.f32 %v291, %v390
    %v392 = vpop.f32.mrb[0].mxu0
    %v393 = vadd.f32 %v291, %v392
    %394 = vdwg.mxu0
    %vm395 = vcmp.gt.f32.partialorder %v373, 0.0
    %vm396 = vcmp.gt.f32.partialorder %v375, 0.0
    %vm397 = vcmp.gt.f32.partialorder %v379, 0.0
    %vm398 = vcmp.gt.f32.partialorder %v381, 0.0
    %vm399 = vcmp.gt.f32.partialorder %v385, 0.0
    %vm400 = vcmp.gt.f32.partialorder %v387, 0.0
    %vm401 = vcmp.gt.f32.partialorder %v391, 0.0
    %vm402 = vcmp.gt.f32.partialorder %v393, 0.0
    %v403 = vmin.f32 %v373, 0.0
    %v404 = vmin.f32 %v375, 0.0
    %v405 = vmin.f32 %v379, 0.0
    %v406 = vmin.f32 %v381, 0.0
    %v407 = vmin.f32 %v385, 0.0
    %v408 = vmin.f32 %v387, 0.0
    %v409 = vmin.f32 %v391, 0.0
    %v410 = vmin.f32 %v393, 0.0
    %v411 = vmul.f32 %v403, 1.442695
    %v412 = vpow.pop %v411
    %v413 = vmul.f32 %v404, 1.442695
    %v414 = vpow.pop %v413
    %v415 = vmul.f32 %v405, 1.442695
    %v416 = vpow.pop %v415
    %v417 = vmul.f32 %v406, 1.442695
    %v418 = vpow.pop %v417
    %v419 = vmul.f32 %v407, 1.442695
    %v420 = vpow.pop %v419
    %v421 = vmul.f32 %v408, 1.442695
    %v422 = vpow.pop %v421
    %v423 = vmul.f32 %v409, 1.442695
    %v424 = vpow.pop %v423
    %v425 = vmul.f32 %v410, 1.442695
    %v426 = vpow.pop %v425
    %v427 = vsub.f32 %v412, 1.0
    %v428 = vsub.f32 %v414, 1.0
    %v429 = vsub.f32 %v416, 1.0
    %v430 = vsub.f32 %v418, 1.0
    %v431 = vsub.f32 %v420, 1.0
    %v432 = vsub.f32 %v422, 1.0
    %v433 = vsub.f32 %v424, 1.0
    %v434 = vsub.f32 %v426, 1.0
    %v435 = vsel %vm395, %v373, %v427
    %v436 = vsel %vm396, %v375, %v428
    %v437 = vsel %vm397, %v379, %v429
    %v438 = vsel %vm398, %v381, %v430
    %v439 = vsel %vm399, %v385, %v431
    %v440 = vsel %vm400, %v387, %v432
    %v441 = vsel %vm401, %v391, %v433
    %v442 = vsel %vm402, %v393, %v434
    %v443 = vadd.f32 %v435, %v437
    %v444 = vadd.f32 %v443, %v439
    %v445 = vadd.f32 %v444, %v441
    %v446 = vrot.slane %v445, 4
    %v447 = vadd.f32 %v445, %v446
    %v448 = vrot.slane %v447, 2
    %v449 = vadd.f32 %v447, %v448
    %v450 = vrot.slane %v449, 1
    %v451 = vadd.f32 %v449, %v450
    %v452 = vadd.f32 %v436, %v438
    %v453 = vadd.f32 %v452, %v440
    %v454 = vadd.f32 %v453, %v442
    %v455 = vrot.slane %v454, 4
    %v456 = vadd.f32 %v454, %v455
    %v457 = vrot.slane %v456, 2
    %v458 = vadd.f32 %v456, %v457
    %v459 = vrot.slane %v458, 1
    %v460 = vadd.f32 %v458, %v459
    %v461 = vmul.f32 %v451, %v222
    %v462 = vmul.f32 %v460, %v222
    %v463 = vsub.f32 %v435, %v461
    %v464 = vsub.f32 %v436, %v462
    %v465 = vsub.f32 %v437, %v461
    %v466 = vsub.f32 %v438, %v462
    %v467 = vsub.f32 %v439, %v461
    %v468 = vsub.f32 %v440, %v462
    %v469 = vsub.f32 %v441, %v461
    %v470 = vsub.f32 %v442, %v462
    %v471 = vmul.f32 %v463, %v463
    %v472 = vmul.f32 %v464, %v464
    %v473 = vmul.f32 %v465, %v465
    %v474 = vmul.f32 %v466, %v466
    %v475 = vmul.f32 %v467, %v467
    %v476 = vmul.f32 %v468, %v468
    %v477 = vmul.f32 %v469, %v469
    %v478 = vmul.f32 %v470, %v470
    %v479 = vadd.f32 %v471, %v473
    %v480 = vadd.f32 %v479, %v475
    %v481 = vadd.f32 %v480, %v477
    %v482 = vrot.slane %v481, 4
    %v483 = vadd.f32 %v481, %v482
    %v484 = vrot.slane %v483, 2
    %v485 = vadd.f32 %v483, %v484
    %v486 = vrot.slane %v485, 1
    %v487 = vadd.f32 %v485, %v486
    %v488 = vadd.f32 %v472, %v474
    %v489 = vadd.f32 %v488, %v476
    %v490 = vadd.f32 %v489, %v478
    %v491 = vrot.slane %v490, 4
    %v492 = vadd.f32 %v490, %v491
    %v493 = vrot.slane %v492, 2
    %v494 = vadd.f32 %v492, %v493
    %v495 = vrot.slane %v494, 1
    %v496 = vadd.f32 %v494, %v495
    %v497 = vmul.f32 %v487, %v222
    %v498 = vmul.f32 %v496, %v222
    %v499 = vadd.f32 %v497, 1e-05
    %v500 = vadd.f32 %v498, 1e-05
    %v501 = vrsqrt.pop %v499
    %v502 = vrsqrt.pop %v500
    %v503 = vmul.f32 %v463, %v501
    %v504 = vmul.f32 %v464, %v502
    %v505 = vmul.f32 %v465, %v501
    %v506 = vmul.f32 %v466, %v502
    %v507 = vmul.f32 %v467, %v501
    %v508 = vmul.f32 %v468, %v502
    %v509 = vmul.f32 %v469, %v501
    %v510 = vmul.f32 %v470, %v502
    %v511 = vld [vmem:[%s1 + $0x40] sm:$0xff]
    %v512 = vld [vmem:[%s1 + $0x48] sm:$0xff]
    %v513 = vld [vmem:[%s1 + $0x50] sm:$0xff]
    %v514 = vld [vmem:[%s1 + $0x58] sm:$0xff]
    %v515 = vld [vmem:[%s1 + $0x60] sm:$0xff]
    %v516 = vld [vmem:[%s1 + $0x68] sm:$0xff]
    %v517 = vld [vmem:[%s1 + $0x70] sm:$0xff]
    %v518 = vld [vmem:[%s1 + $0x78] sm:$0xff]
    %v519 = vld [vmem:[%s2] sm:$0xff]
    %v520 = vld [vmem:[%s2 + $0x8] sm:$0xff]
    %v521 = vld [vmem:[%s2 + $0x10] sm:$0xff]
    %v522 = vld [vmem:[%s2 + $0x18] sm:$0xff]
    %v523 = vld [vmem:[%s2 + $0x20] sm:$0xff]
    %v524 = vld [vmem:[%s2 + $0x28] sm:$0xff]
    %v525 = vld [vmem:[%s2 + $0x30] sm:$0xff]
    %v526 = vld [vmem:[%s2 + $0x38] sm:$0xff]
    %528 = vset.pattern.permute.xlu0 2
    %529 = vperm.xlu0 %528, %v519
    %v530 = vpop.permute.xlu0 %529
    %533 = vset.pattern.permute.xlu0 2
    %534 = vperm.xlu0 %533, %v520
    %v535 = vpop.permute.xlu0 %534
    %538 = vset.pattern.permute.xlu0 2
    %539 = vperm.xlu0 %538, %v521
    %v540 = vpop.permute.xlu0 %539
    %543 = vset.pattern.permute.xlu0 2
    %544 = vperm.xlu0 %543, %v522
    %v545 = vpop.permute.xlu0 %544
    %548 = vset.pattern.permute.xlu0 2
    %549 = vperm.xlu0 %548, %v523
    %v550 = vpop.permute.xlu0 %549
    %553 = vset.pattern.permute.xlu0 2
    %554 = vperm.xlu0 %553, %v524
    %v555 = vpop.permute.xlu0 %554
    %558 = vset.pattern.permute.xlu0 2
    %559 = vperm.xlu0 %558, %v525
    %v560 = vpop.permute.xlu0 %559
    %563 = vset.pattern.permute.xlu0 2
    %564 = vperm.xlu0 %563, %v526
    %v565 = vpop.permute.xlu0 %564
    %v568 = vsel %vm293, %v511, 0
    %v571 = vsel %vm293, %v512, 0
    %v574 = vsel %vm293, %v513, 0
    %v577 = vsel %vm293, %v514, 0
    %v580 = vsel %vm293, %v515, 0
    %v583 = vsel %vm293, %v516, 0
    %v586 = vsel %vm293, %v517, 0
    %v589 = vsel %vm293, %v518, 0
    %591 = vmatprep.subr.mxu0 %v504
    %592 = vmatpush1.msra.mxu0 %v503
    %593 = vmatprep.subr.mxu0 %v506
    %594 = vmatpush1.msra.mxu0 %v505
    %595 = vmatprep.subr.mxu0 %v508
    %596 = vmatpush1.msra.mxu0 %v507
    %597 = vmatprep.subr.mxu0 %v510
    %598 = vmatpush1.msra.mxu0 %v509
    %599 = vmatprep.subr.mxu0 0.0
    %600 = vmatpush1.msra.mxu0 0.0
    %601 = vmatprep.subr.mxu0 0.0
    %602 = vmatpush1.msra.mxu0 0.0
    %603 = vmatprep.subr.mxu0 0.0
    %604 = vmatpush1.msra.mxu0 0.0
    %605 = vmatprep.subr.mxu0 0.0
    %606 = vmatpush1.msra.mxu0 0.0
    %607 = vmatprep.subr.mxu0 0.0
    %608 = vmatpush1.msra.mxu0 0.0
    %609 = vmatprep.subr.mxu0 0.0
    %610 = vmatpush1.msra.mxu0 0.0
    %611 = vmatprep.subr.mxu0 0.0
    %612 = vmatpush1.msra.mxu0 0.0
    %613 = vmatprep.subr.mxu0 0.0
    %614 = vmatpush1.msra.mxu0 0.0
    %615 = vmatprep.subr.mxu0 0.0
    %616 = vmatpush1.msra.mxu0 0.0
    %617 = vmatprep.subr.mxu0 0.0
    %618 = vmatpush1.msra.mxu0 0.0
    %619 = vmatprep.subr.mxu0 0.0
    %620 = vmatpush1.msra.mxu0 0.0
    %621 = vmatprep.subr.mxu0 0.0
    %622 = vmatpush1.msra.mxu0 0.0
    %623 = vmatprep.subr.mxu0 0.0
    %624 = vmatpush1.msra.mxu0 0.0
    %625 = vmatprep.subr.mxu0 0.0
    %626 = vmatpush1.msra.mxu0 0.0
    %627 = vmatprep.subr.mxu0 0.0
    %628 = vmatpush1.msra.mxu0 0.0
    %629 = vmatprep.subr.mxu0 0.0
    %630 = vmatpush1.msra.mxu0 0.0
    %631 = vmatprep.subr.mxu0 0.0
    %632 = vmatpush1.msra.mxu0 0.0
    %633 = vmatprep.subr.mxu0 0.0
    %634 = vmatpush1.msra.mxu0 0.0
    %635 = vmatprep.subr.mxu0 0.0
    %636 = vmatpush1.msra.mxu0 0.0
    %637 = vmatprep.subr.mxu0 0.0
    %638 = vmatpush1.msra.mxu0 0.0
    %639 = vmatprep.subr.mxu0 0.0
    %640 = vmatpush1.msra.mxu0 0.0
    %641 = vmatprep.subr.mxu0 0.0
    %642 = vmatpush1.msra.mxu0 0.0
    %643 = vmatprep.subr.mxu0 0.0
    %644 = vmatpush1.msra.mxu0 0.0
    %645 = vmatprep.subr.mxu0 0.0
    %646 = vmatpush1.msra.mxu0 0.0
    %647 = vmatprep.subr.mxu0 0.0
    %648 = vmatpush1.msra.mxu0 0.0
    %649 = vmatprep.subr.mxu0 0.0
    %650 = vmatpush1.msra.mxu0 0.0
    %651 = vmatprep.subr.mxu0 0.0
    %652 = vmatpush1.msra.mxu0 0.0
    %653 = vmatprep.subr.mxu0 0.0
    %654 = vmatpush1.msra.mxu0 0.0
    %655 = vmatprep.mubr.f32.mxu0 0.0
    %656 = vmatmul.mubr.f32.gmra.mrb[0].mxu0 %v568
    %v657 = vpop.f32.mrb[0].mxu0
    %v658 = vadd.f32 %v530, %v657
    %v659 = vpop.f32.mrb[0].mxu0
    %v660 = vadd.f32 %v530, %v659
    %661 = vmatprep.mubr.f32.mxu0 0.0
    %662 = vmatmul.mubr.f32.gmra.mrb[0].mxu0 %v571
    %v663 = vpop.f32.mrb[0].mxu0
    %v664 = vadd.f32 %v535, %v663
    %v665 = vpop.f32.mrb[0].mxu0
    %v666 = vadd.f32 %v535, %v665
    %667 = vmatprep.mubr.f32.mxu0 0.0
    %668 = vmatmul.mubr.f32.gmra.mrb[0].mxu0 %v574
    %v669 = vpop.f32.mrb[0].mxu0
    %v670 = vadd.f32 %v540, %v669
    %v671 = vpop.f32.mrb[0].mxu0
    %v672 = vadd.f32 %v540, %v671
    %673 = vmatprep.mubr.f32.mxu0 0.0
    %674 = vmatmul.mubr.f32.gmra.mrb[0].mxu0 %v577
    %v675 = vpop.f32.mrb[0].mxu0
    %v676 = vadd.f32 %v545, %v675
    %v677 = vpop.f32.mrb[0].mxu0
    %v678 = vadd.f32 %v545, %v677
    %679 = vmatprep.mubr.f32.mxu0 0.0
    %680 = vmatmul.mubr.f32.gmra.mrb[0].mxu0 %v580
    %v681 = vpop.f32.mrb[0].mxu0
    %v682 = vadd.f32 %v550, %v681
    %v683 = vpop.f32.mrb[0].mxu0
    %v684 = vadd.f32 %v550, %v683
    %685 = vmatprep.mubr.f32.mxu0 0.0
    %686 = vmatmul.mubr.f32.gmra.mrb[0].mxu0 %v583
    %v687 = vpop.f32.mrb[0].mxu0
    %v688 = vadd.f32 %v555, %v687
    %v689 = vpop.f32.mrb[0].mxu0
    %v690 = vadd.f32 %v555, %v689
    %691 = vmatprep.mubr.f32.mxu0 0.0
    %692 = vmatmul.mubr.f32.gmra.mrb[0].mxu0 %v586
    %v693 = vpop.f32.mrb[0].mxu0
    %v694 = vadd.f32 %v560, %v693
    %v695 = vpop.f32.mrb[0].mxu0
    %v696 = vadd.f32 %v560, %v695
    %697 = vmatprep.mubr.f32.mxu0 0.0
    %698 = vmatmul.mubr.f32.gmra.mrb[0].mxu0 %v589
    %v699 = vpop.f32.mrb[0].mxu0
    %v700 = vadd.f32 %v565, %v699
    %v701 = vpop.f32.mrb[0].mxu0
    %v702 = vadd.f32 %v565, %v701
    %703 = vdwg.mxu0
    %vm704 = vcmp.gt.f32.partialorder %v658, 0.0
    %vm705 = vcmp.gt.f32.partialorder %v660, 0.0
    %vm706 = vcmp.gt.f32.partialorder %v664, 0.0
    %vm707 = vcmp.gt.f32.partialorder %v666, 0.0
    %vm708 = vcmp.gt.f32.partialorder %v670, 0.0
    %vm709 = vcmp.gt.f32.partialorder %v672, 0.0
    %vm710 = vcmp.gt.f32.partialorder %v676, 0.0
    %vm711 = vcmp.gt.f32.partialorder %v678, 0.0
    %vm712 = vcmp.gt.f32.partialorder %v682, 0.0
    %vm713 = vcmp.gt.f32.partialorder %v684, 0.0
    %vm714 = vcmp.gt.f32.partialorder %v688, 0.0
    %vm715 = vcmp.gt.f32.partialorder %v690, 0.0
    %vm716 = vcmp.gt.f32.partialorder %v694, 0.0
    %vm717 = vcmp.gt.f32.partialorder %v696, 0.0
    %vm718 = vcmp.gt.f32.partialorder %v700, 0.0
    %vm719 = vcmp.gt.f32.partialorder %v702, 0.0
    %v720 = vmin.f32 %v658, 0.0
    %v721 = vmin.f32 %v660, 0.0
    %v722 = vmin.f32 %v664, 0.0
    %v723 = vmin.f32 %v666, 0.0
    %v724 = vmin.f32 %v670, 0.0
    %v725 = vmin.f32 %v672, 0.0
    %v726 = vmin.f32 %v676, 0.0
    %v727 = vmin.f32 %v678, 0.0
    %v728 = vmin.f32 %v682, 0.0
    %v729 = vmin.f32 %v684, 0.0
    %v730 = vmin.f32 %v688, 0.0
    %v731 = vmin.f32 %v690, 0.0
    %v732 = vmin.f32 %v694, 0.0
    %v733 = vmin.f32 %v696, 0.0
    %v734 = vmin.f32 %v700, 0.0
    %v735 = vmin.f32 %v702, 0.0
    %v736 = vmul.f32 %v720, 1.442695
    %v737 = vpow.pop %v736
    %v738 = vmul.f32 %v721, 1.442695
    %v739 = vpow.pop %v738
    %v740 = vmul.f32 %v722, 1.442695
    %v741 = vpow.pop %v740
    %v742 = vmul.f32 %v723, 1.442695
    %v743 = vpow.pop %v742
    %v744 = vmul.f32 %v724, 1.442695
    %v745 = vpow.pop %v744
    %v746 = vmul.f32 %v725, 1.442695
    %v747 = vpow.pop %v746
    %v748 = vmul.f32 %v726, 1.442695
    %v749 = vpow.pop %v748
    %v750 = vmul.f32 %v727, 1.442695
    %v751 = vpow.pop %v750
    %v752 = vmul.f32 %v728, 1.442695
    %v753 = vpow.pop %v752
    %v754 = vmul.f32 %v729, 1.442695
    %v755 = vpow.pop %v754
    %v756 = vmul.f32 %v730, 1.442695
    %v757 = vpow.pop %v756
    %v758 = vmul.f32 %v731, 1.442695
    %v759 = vpow.pop %v758
    %v760 = vmul.f32 %v732, 1.442695
    %v761 = vpow.pop %v760
    %v762 = vmul.f32 %v733, 1.442695
    %v763 = vpow.pop %v762
    %v764 = vmul.f32 %v734, 1.442695
    %v765 = vpow.pop %v764
    %v766 = vmul.f32 %v735, 1.442695
    %v767 = vpow.pop %v766
    %v768 = vsub.f32 %v737, 1.0
    %v769 = vsub.f32 %v739, 1.0
    %v770 = vsub.f32 %v741, 1.0
    %v771 = vsub.f32 %v743, 1.0
    %v772 = vsub.f32 %v745, 1.0
    %v773 = vsub.f32 %v747, 1.0
    %v774 = vsub.f32 %v749, 1.0
    %v775 = vsub.f32 %v751, 1.0
    %v776 = vsub.f32 %v753, 1.0
    %v777 = vsub.f32 %v755, 1.0
    %v778 = vsub.f32 %v757, 1.0
    %v779 = vsub.f32 %v759, 1.0
    %v780 = vsub.f32 %v761, 1.0
    %v781 = vsub.f32 %v763, 1.0
    %v782 = vsub.f32 %v765, 1.0
    %v783 = vsub.f32 %v767, 1.0
    %v784 = vsel %vm704, %v658, %v768
    %v785 = vsel %vm705, %v660, %v769
    %v786 = vsel %vm706, %v664, %v770
    %v787 = vsel %vm707, %v666, %v771
    %v788 = vsel %vm708, %v670, %v772
    %v789 = vsel %vm709, %v672, %v773
    %v790 = vsel %vm710, %v676, %v774
    %v791 = vsel %vm711, %v678, %v775
    %v792 = vsel %vm712, %v682, %v776
    %v793 = vsel %vm713, %v684, %v777
    %v794 = vsel %vm714, %v688, %v778
    %v795 = vsel %vm715, %v690, %v779
    %v796 = vsel %vm716, %v694, %v780
    %v797 = vsel %vm717, %v696, %v781
    %v798 = vsel %vm718, %v700, %v782
    %v799 = vsel %vm719, %v702, %v783
    %v800 = vadd.f32 %v784, %v786
    %v801 = vadd.f32 %v800, %v788
    %v802 = vadd.f32 %v801, %v790
    %v803 = vadd.f32 %v802, %v792
    %v804 = vadd.f32 %v803, %v794
    %v805 = vadd.f32 %v804, %v796
    %v806 = vadd.f32 %v805, %v798
    %v807 = vrot.slane %v806, 4
    %v808 = vadd.f32 %v806, %v807
    %v809 = vrot.slane %v808, 2
    %v810 = vadd.f32 %v808, %v809
    %v811 = vrot.slane %v810, 1
    %v812 = vadd.f32 %v810, %v811
    %v813 = vadd.f32 %v785, %v787
    %v814 = vadd.f32 %v813, %v789
    %v815 = vadd.f32 %v814, %v791
    %v816 = vadd.f32 %v815, %v793
    %v817 = vadd.f32 %v816, %v795
    %v818 = vadd.f32 %v817, %v797
    %v819 = vadd.f32 %v818, %v799
    %v820 = vrot.slane %v819, 4
    %v821 = vadd.f32 %v819, %v820
    %v822 = vrot.slane %v821, 2
    %v823 = vadd.f32 %v821, %v822
    %v824 = vrot.slane %v823, 1
    %v825 = vadd.f32 %v823, %v824
    %v826 = vrcp.pop 64.0
    %v827 = vmul.f32 %v812, %v826
    %v828 = vmul.f32 %v825, %v826
    %v829 = vsub.f32 %v784, %v827
    %v830 = vsub.f32 %v785, %v828
    %v831 = vsub.f32 %v786, %v827
    %v832 = vsub.f32 %v787, %v828
    %v833 = vsub.f32 %v788, %v827
    %v834 = vsub.f32 %v789, %v828
    %v835 = vsub.f32 %v790, %v827
    %v836 = vsub.f32 %v791, %v828
    %v837 = vsub.f32 %v792, %v827
    %v838 = vsub.f32 %v793, %v828
    %v839 = vsub.f32 %v794, %v827
    %v840 = vsub.f32 %v795, %v828
    %v841 = vsub.f32 %v796, %v827
    %v842 = vsub.f32 %v797, %v828
    %v843 = vsub.f32 %v798, %v827
    %v844 = vsub.f32 %v799, %v828
    %v845 = vmul.f32 %v829, %v829
    %v846 = vmul.f32 %v830, %v830
    %v847 = vmul.f32 %v831, %v831
    %v848 = vmul.f32 %v832, %v832
    %v849 = vmul.f32 %v833, %v833
    %v850 = vmul.f32 %v834, %v834
    %v851 = vmul.f32 %v835, %v835
    %v852 = vmul.f32 %v836, %v836
    %v853 = vmul.f32 %v837, %v837
    %v854 = vmul.f32 %v838, %v838
    %v855 = vmul.f32 %v839, %v839
    %v856 = vmul.f32 %v840, %v840
    %v857 = vmul.f32 %v841, %v841
    %v858 = vmul.f32 %v842, %v842
    %v859 = vmul.f32 %v843, %v843
    %v860 = vmul.f32 %v844, %v844
    %v861 = vadd.f32 %v845, %v847
    %v862 = vadd.f32 %v861, %v849
    %v863 = vadd.f32 %v862, %v851
    %v864 = vadd.f32 %v863, %v853
    %v865 = vadd.f32 %v864, %v855
    %v866 = vadd.f32 %v865, %v857
    %v867 = vadd.f32 %v866, %v859
    %v868 = vrot.slane %v867, 4
    %v869 = vadd.f32 %v867, %v868
    %v870 = vrot.slane %v869, 2
    %v871 = vadd.f32 %v869, %v870
    %v872 = vrot.slane %v871, 1
    %v873 = vadd.f32 %v871, %v872
    %v874 = vadd.f32 %v846, %v848
    %v875 = vadd.f32 %v874, %v850
    %v876 = vadd.f32 %v875, %v852
    %v877 = vadd.f32 %v876, %v854
    %v878 = vadd.f32 %v877, %v856
    %v879 = vadd.f32 %v878, %v858
    %v880 = vadd.f32 %v879, %v860
    %v881 = vrot.slane %v880, 4
    %v882 = vadd.f32 %v880, %v881
    %v883 = vrot.slane %v882, 2
    %v884 = vadd.f32 %v882, %v883
    %v885 = vrot.slane %v884, 1
    %v886 = vadd.f32 %v884, %v885
    %v887 = vmul.f32 %v873, %v826
    %v888 = vmul.f32 %v886, %v826
    %v889 = vadd.f32 %v887, 1e-05
    %v890 = vadd.f32 %v888, 1e-05
    %v891 = vrsqrt.pop %v889
    %v892 = vrsqrt.pop %v890
    %v893 = vmul.f32 %v829, %v891
    %v894 = vmul.f32 %v830, %v892
    %v895 = vmul.f32 %v831, %v891
    %v896 = vmul.f32 %v832, %v892
    %v897 = vmul.f32 %v833, %v891
    %v898 = vmul.f32 %v834, %v892
    %v899 = vmul.f32 %v835, %v891
    %v900 = vmul.f32 %v836, %v892
    %v901 = vmul.f32 %v837, %v891
    %v902 = vmul.f32 %v838, %v892
    %v903 = vmul.f32 %v839, %v891
    %v904 = vmul.f32 %v840, %v892
    %v905 = vmul.f32 %v841, %v891
    %v906 = vmul.f32 %v842, %v892
    %v907 = vmul.f32 %v843, %v891
    %v908 = vmul.f32 %v844, %v892
    %v909 = vld [vmem:[%s1 + $0x80] sm:$0xff]
    %v910 = vld [vmem:[%s1 + $0x88] sm:$0xff]
    %v911 = vld [vmem:[%s1 + $0x90] sm:$0xff]
    %v912 = vld [vmem:[%s1 + $0x98] sm:$0xff]
    %913 = vset.pattern.permute.xlu0 3
    %914 = vperm.xlu0 %913, %v23
    %v915 = vpop.permute.xlu0 %914
    %917 = vset.pattern.permute.xlu0 3
    %918 = vperm.xlu0 %917, %v24
    %v919 = vpop.permute.xlu0 %918
    %921 = vset.pattern.permute.xlu0 3
    %922 = vperm.xlu0 %921, %v25
    %v923 = vpop.permute.xlu0 %922
    %925 = vset.pattern.permute.xlu0 3
    %926 = vperm.xlu0 %925, %v26
    %v927 = vpop.permute.xlu0 %926
    %vm929 = vcmask 523264
    %v931 = vsel %vm929, %v909, 0
    %v934 = vsel %vm929, %v910, 0
    %v937 = vsel %vm929, %v911, 0
    %v940 = vsel %vm929, %v912, 0
    %942 = vmatprep.subr.mxu0 %v894
    %943 = vmatpush1.msra.mxu0 %v893
    %944 = vmatprep.subr.mxu0 %v896
    %945 = vmatpush1.msra.mxu0 %v895
    %946 = vmatprep.subr.mxu0 %v898
    %947 = vmatpush1.msra.mxu0 %v897
    %948 = vmatprep.subr.mxu0 %v900
    %949 = vmatpush1.msra.mxu0 %v899
    %950 = vmatprep.subr.mxu0 %v902
    %951 = vmatpush1.msra.mxu0 %v901
    %952 = vmatprep.subr.mxu0 %v904
    %953 = vmatpush1.msra.mxu0 %v903
    %954 = vmatprep.subr.mxu0 %v906
    %955 = vmatpush1.msra.mxu0 %v905
    %956 = vmatprep.subr.mxu0 %v908
    %957 = vmatpush1.msra.mxu0 %v907
    %958 = vmatprep.subr.mxu0 0.0
    %959 = vmatpush1.msra.mxu0 0.0
    %960 = vmatprep.subr.mxu0 0.0
    %961 = vmatpush1.msra.mxu0 0.0
    %962 = vmatprep.subr.mxu0 0.0
    %963 = vmatpush1.msra.mxu0 0.0
    %964 = vmatprep.subr.mxu0 0.0
    %965 = vmatpush1.msra.mxu0 0.0
    %966 = vmatprep.subr.mxu0 0.0
    %967 = vmatpush1.msra.mxu0 0.0
    %968 = vmatprep.subr.mxu0 0.0
    %969 = vmatpush1.msra.mxu0 0.0
    %970 = vmatprep.subr.mxu0 0.0
    %971 = vmatpush1.msra.mxu0 0.0
    %972 = vmatprep.subr.mxu0 0.0
    %973 = vmatpush1.msra.mxu0 0.0
    %974 = vmatprep.subr.mxu0 0.0
    %975 = vmatpush1.msra.mxu0 0.0
    %976 = vmatprep.subr.mxu0 0.0
    %977 = vmatpush1.msra.mxu0 0.0
    %978 = vmatprep.subr.mxu0 0.0
    %979 = vmatpush1.msra.mxu0 0.0
    %980 = vmatprep.subr.mxu0 0.0
    %981 = vmatpush1.msra.mxu0 0.0
    %982 = vmatprep.subr.mxu0 0.0
    %983 = vmatpush1.msra.mxu0 0.0
    %984 = vmatprep.subr.mxu0 0.0
    %985 = vmatpush1.msra.mxu0 0.0
    %986 = vmatprep.subr.mxu0 0.0
    %987 = vmatpush1.msra.mxu0 0.0
    %988 = vmatprep.subr.mxu0 0.0
    %989 = vmatpush1.msra.mxu0 0.0
    %990 = vmatprep.subr.mxu0 0.0
    %991 = vmatpush1.msra.mxu0 0.0
    %992 = vmatprep.subr.mxu0 0.0
    %993 = vmatpush1.msra.mxu0 0.0
    %994 = vmatprep.subr.mxu0 0.0
    %995 = vmatpush1.msra.mxu0 0.0
    %996 = vmatprep.subr.mxu0 0.0
    %997 = vmatpush1.msra.mxu0 0.0
    %998 = vmatprep.subr.mxu0 0.0
    %999 = vmatpush1.msra.mxu0 0.0
    %1000 = vmatprep.subr.mxu0 0.0
    %1001 = vmatpush1.msra.mxu0 0.0
    %1002 = vmatprep.subr.mxu0 0.0
    %1003 = vmatpush1.msra.mxu0 0.0
    %1004 = vmatprep.subr.mxu0 0.0
    %1005 = vmatpush1.msra.mxu0 0.0
    %1006 = vmatprep.mubr.f32.mxu0 0.0
    %1007 = vmatmul.mubr.f32.gmra.mrb[0].mxu0 %v931
    %v1008 = vpop.f32.mrb[0].mxu0
    %v1009 = vadd.f32 %v915, %v1008
    %v1010 = vpop.f32.mrb[0].mxu0
    %v1011 = vadd.f32 %v915, %v1010
    %1012 = vmatprep.mubr.f32.mxu0 0.0
    %1013 = vmatmul.mubr.f32.gmra.mrb[0].mxu0 %v934
    %v1014 = vpop.f32.mrb[0].mxu0
    %v1015 = vadd.f32 %v919, %v1014
    %v1016 = vpop.f32.mrb[0].mxu0
    %v1017 = vadd.f32 %v919, %v1016
    %1018 = vmatprep.mubr.f32.mxu0 0.0
    %1019 = vmatmul.mubr.f32.gmra.mrb[0].mxu0 %v937
    %v1020 = vpop.f32.mrb[0].mxu0
    %v1021 = vadd.f32 %v923, %v1020
    %v1022 = vpop.f32.mrb[0].mxu0
    %v1023 = vadd.f32 %v923, %v1022
    %1024 = vmatprep.mubr.f32.mxu0 0.0
    %1025 = vmatmul.mubr.f32.gmra.mrb[0].mxu0 %v940
    %v1026 = vpop.f32.mrb[0].mxu0
    %v1027 = vadd.f32 %v927, %v1026
    %v1028 = vpop.f32.mrb[0].mxu0
    %v1029 = vadd.f32 %v927, %v1028
    %1030 = vdwg.mxu0
    %vm1031 = vcmp.gt.f32.partialorder %v1009, 0.0
    %vm1032 = vcmp.gt.f32.partialorder %v1011, 0.0
    %vm1033 = vcmp.gt.f32.partialorder %v1015, 0.0
    %vm1034 = vcmp.gt.f32.partialorder %v1017, 0.0
    %vm1035 = vcmp.gt.f32.partialorder %v1021, 0.0
    %vm1036 = vcmp.gt.f32.partialorder %v1023, 0.0
    %vm1037 = vcmp.gt.f32.partialorder %v1027, 0.0
    %vm1038 = vcmp.gt.f32.partialorder %v1029, 0.0
    %v1039 = vmin.f32 %v1009, 0.0
    %v1040 = vmin.f32 %v1011, 0.0
    %v1041 = vmin.f32 %v1015, 0.0
    %v1042 = vmin.f32 %v1017, 0.0
    %v1043 = vmin.f32 %v1021, 0.0
    %v1044 = vmin.f32 %v1023, 0.0
    %v1045 = vmin.f32 %v1027, 0.0
    %v1046 = vmin.f32 %v1029, 0.0
    %v1047 = vmul.f32 %v1039, 1.442695
    %v1048 = vpow.pop %v1047
    %v1049 = vmul.f32 %v1040, 1.442695
    %v1050 = vpow.pop %v1049
    %v1051 = vmul.f32 %v1041, 1.442695
    %v1052 = vpow.pop %v1051
    %v1053 = vmul.f32 %v1042, 1.442695
    %v1054 = vpow.pop %v1053
    %v1055 = vmul.f32 %v1043, 1.442695
    %v1056 = vpow.pop %v1055
    %v1057 = vmul.f32 %v1044, 1.442695
    %v1058 = vpow.pop %v1057
    %v1059 = vmul.f32 %v1045, 1.442695
    %v1060 = vpow.pop %v1059
    %v1061 = vmul.f32 %v1046, 1.442695
    %v1062 = vpow.pop %v1061
    %v1063 = vsub.f32 %v1048, 1.0
    %v1064 = vsub.f32 %v1050, 1.0
    %v1065 = vsub.f32 %v1052, 1.0
    %v1066 = vsub.f32 %v1054, 1.0
    %v1067 = vsub.f32 %v1056, 1.0
    %v1068 = vsub.f32 %v1058, 1.0
    %v1069 = vsub.f32 %v1060, 1.0
    %v1070 = vsub.f32 %v1062, 1.0
    %v1071 = vsel %vm1031, %v1009, %v1063
    %v1072 = vsel %vm1032, %v1011, %v1064
    %v1073 = vsel %vm1033, %v1015, %v1065
    %v1074 = vsel %vm1034, %v1017, %v1066
    %v1075 = vsel %vm1035, %v1021, %v1067
    %v1076 = vsel %vm1036, %v1023, %v1068
    %v1077 = vsel %vm1037, %v1027, %v1069
    %v1078 = vsel %vm1038, %v1029, %v1070
    %v1079 = vadd.f32 %v1071, %v1073
    %v1080 = vadd.f32 %v1079, %v1075
    %v1081 = vadd.f32 %v1080, %v1077
    %v1082 = vrot.slane %v1081, 4
    %v1083 = vadd.f32 %v1081, %v1082
    %v1084 = vrot.slane %v1083, 2
    %v1085 = vadd.f32 %v1083, %v1084
    %v1086 = vrot.slane %v1085, 1
    %v1087 = vadd.f32 %v1085, %v1086
    %v1088 = vadd.f32 %v1072, %v1074
    %v1089 = vadd.f32 %v1088, %v1076
    %v1090 = vadd.f32 %v1089, %v1078
    %v1091 = vrot.slane %v1090, 4
    %v1092 = vadd.f32 %v1090, %v1091
    %v1093 = vrot.slane %v1092, 2
    %v1094 = vadd.f32 %v1092, %v1093
    %v1095 = vrot.slane %v1094, 1
    %v1096 = vadd.f32 %v1094, %v1095
    %v1097 = vmul.f32 %v1087, %v222
    %v1098 = vmul.f32 %v1096, %v222
    %v1099 = vsub.f32 %v1071, %v1097
    %v1100 = vsub.f32 %v1072, %v1098
    %v1101 = vsub.f32 %v1073, %v1097
    %v1102 = vsub.f32 %v1074, %v1098
    %v1103 = vsub.f32 %v1075, %v1097
    %v1104 = vsub.f32 %v1076, %v1098
    %v1105 = vsub.f32 %v1077, %v1097
    %v1106 = vsub.f32 %v1078, %v1098
    %v1107 = vmul.f32 %v1099, %v1099
    %v1108 = vmul.f32 %v1100, %v1100
    %v1109 = vmul.f32 %v1101, %v1101
    %v1110 = vmul.f32 %v1102, %v1102
    %v1111 = vmul.f32 %v1103, %v1103
    %v1112 = vmul.f32 %v1104, %v1104
    %v1113 = vmul.f32 %v1105, %v1105
    %v1114 = vmul.f32 %v1106, %v1106
    %v1115 = vadd.f32 %v1107, %v1109
    %v1116 = vadd.f32 %v1115, %v1111
    %v1117 = vadd.f32 %v1116, %v1113
    %v1118 = vrot.slane %v1117, 4
    %v1119 = vadd.f32 %v1117, %v1118
    %v1120 = vrot.slane %v1119, 2
    %v1121 = vadd.f32 %v1119, %v1120
    %v1122 = vrot.slane %v1121, 1
    %v1123 = vadd.f32 %v1121, %v1122
    %v1124 = vadd.f32 %v1108, %v1110
    %v1125 = vadd.f32 %v1124, %v1112
    %v1126 = vadd.f32 %v1125, %v1114
    %v1127 = vrot.slane %v1126, 4
    %v1128 = vadd.f32 %v1126, %v1127
    %v1129 = vrot.slane %v1128, 2
    %v1130 = vadd.f32 %v1128, %v1129
    %v1131 = vrot.slane %v1130, 1
    %v1132 = vadd.f32 %v1130, %v1131
    %v1133 = vmul.f32 %v1123, %v222
    %v1134 = vmul.f32 %v1132, %v222
    %v1135 = vadd.f32 %v1133, 1e-05
    %v1136 = vadd.f32 %v1134, 1e-05
    %v1137 = vrsqrt.pop %v1135
    %v1138 = vrsqrt.pop %v1136
    %v1139 = vmul.f32 %v1099, %v1137
    %v1140 = vmul.f32 %v1100, %v1138
    %v1141 = vmul.f32 %v1101, %v1137
    %v1142 = vmul.f32 %v1102, %v1138
    %v1143 = vmul.f32 %v1103, %v1137
    %v1144 = vmul.f32 %v1104, %v1138
    %v1145 = vmul.f32 %v1105, %v1137
    %v1146 = vmul.f32 %v1106, %v1138
    %v1147 = vld [vmem:[%s1 + $0xa0] sm:$0xff]
    %v1148 = vld [vmem:[%s1 + $0xa8] sm:$0xff]
    %v1149 = vld [vmem:[%s2] sm:$0xff]
    %v1150 = vld [vmem:[%s2 + $0x8] sm:$0xff]
    %1152 = vset.pattern.permute.xlu0 4
    %1153 = vperm.xlu0 %1152, %v1149
    %v1154 = vpop.permute.xlu0 %1153
    %1157 = vset.pattern.permute.xlu0 4
    %1158 = vperm.xlu0 %1157, %v1150
    %v1159 = vpop.permute.xlu0 %1158
    %v1162 = vsel %vm293, %v1147, 0
    %v1165 = vsel %vm293, %v1148, 0
    %1167 = vmatprep.subr.mxu0 %v1140
    %1168 = vmatpush1.msra.mxu0 %v1139
    %1169 = vmatprep.subr.mxu0 %v1142
    %1170 = vmatpush1.msra.mxu0 %v1141
    %1171 = vmatprep.subr.mxu0 %v1144
    %1172 = vmatpush1.msra.mxu0 %v1143
    %1173 = vmatprep.subr.mxu0 %v1146
    %1174 = vmatpush1.msra.mxu0 %v1145
    %1175 = vmatprep.subr.mxu0 0.0
    %1176 = vmatpush1.msra.mxu0 0.0
    %1177 = vmatprep.subr.mxu0 0.0
    %1178 = vmatpush1.msra.mxu0 0.0
    %1179 = vmatprep.subr.mxu0 0.0
    %1180 = vmatpush1.msra.mxu0 0.0
    %1181 = vmatprep.subr.mxu0 0.0
    %1182 = vmatpush1.msra.mxu0 0.0
    %1183 = vmatprep.subr.mxu0 0.0
    %1184 = vmatpush1.msra.mxu0 0.0
    %1185 = vmatprep.subr.mxu0 0.0
    %1186 = vmatpush1.msra.mxu0 0.0
    %1187 = vmatprep.subr.mxu0 0.0
    %1188 = vmatpush1.msra.mxu0 0.0
    %1189 = vmatprep.subr.mxu0 0.0
    %1190 = vmatpush1.msra.mxu0 0.0
    %1191 = vmatprep.subr.mxu0 0.0
    %1192 = vmatpush1.msra.mxu0 0.0
    %1193 = vmatprep.subr.mxu0 0.0
    %1194 = vmatpush1.msra.mxu0 0.0
    %1195 = vmatprep.subr.mxu0 0.0
    %1196 = vmatpush1.msra.mxu0 0.0
    %1197 = vmatprep.subr.mxu0 0.0
    %1198 = vmatpush1.msra.mxu0 0.0
    %1199 = vmatprep.subr.mxu0 0.0
    %1200 = vmatpush1.msra.mxu0 0.0
    %1201 = vmatprep.subr.mxu0 0.0
    %1202 = vmatpush1.msra.mxu0 0.0
    %1203 = vmatprep.subr.mxu0 0.0
    %1204 = vmatpush1.msra.mxu0 0.0
    %1205 = vmatprep.subr.mxu0 0.0
    %1206 = vmatpush1.msra.mxu0 0.0
    %1207 = vmatprep.subr.mxu0 0.0
    %1208 = vmatpush1.msra.mxu0 0.0
    %1209 = vmatprep.subr.mxu0 0.0
    %1210 = vmatpush1.msra.mxu0 0.0
    %1211 = vmatprep.subr.mxu0 0.0
    %1212 = vmatpush1.msra.mxu0 0.0
    %1213 = vmatprep.subr.mxu0 0.0
    %1214 = vmatpush1.msra.mxu0 0.0
    %1215 = vmatprep.subr.mxu0 0.0
    %1216 = vmatpush1.msra.mxu0 0.0
    %1217 = vmatprep.subr.mxu0 0.0
    %1218 = vmatpush1.msra.mxu0 0.0
    %1219 = vmatprep.subr.mxu0 0.0
    %1220 = vmatpush1.msra.mxu0 0.0
    %1221 = vmatprep.subr.mxu0 0.0
    %1222 = vmatpush1.msra.mxu0 0.0
    %1223 = vmatprep.subr.mxu0 0.0
    %1224 = vmatpush1.msra.mxu0 0.0
    %1225 = vmatprep.subr.mxu0 0.0
    %1226 = vmatpush1.msra.mxu0 0.0
    %1227 = vmatprep.subr.mxu0 0.0
    %1228 = vmatpush1.msra.mxu0 0.0
    %1229 = vmatprep.subr.mxu0 0.0
    %1230 = vmatpush1.msra.mxu0 0.0
    %1231 = vmatprep.mubr.f32.mxu0 0.0
    %1232 = vmatmul.mubr.f32.gmra.mrb[0].mxu0 %v1162
    %v1233 = vpop.f32.mrb[0].mxu0
    %v1234 = vadd.f32 %v1154, %v1233
    %v1235 = vpop.f32.mrb[0].mxu0
    %v1236 = vadd.f32 %v1154, %v1235
    %1237 = vmatprep.mubr.f32.mxu0 0.0
    %1238 = vmatmul.mubr.f32.gmra.mrb[0].mxu0 %v1165
    %v1239 = vpop.f32.mrb[0].mxu0
    %v1240 = vadd.f32 %v1159, %v1239
    %v1241 = vpop.f32.mrb[0].mxu0
    %v1242 = vadd.f32 %v1159, %v1241
    %1243 = vdwg.mxu0
    %vm1244 = vcmp.gt.f32.partialorder %v1234, 0.0
    %vm1245 = vcmp.gt.f32.partialorder %v1236, 0.0
    %vm1246 = vcmp.gt.f32.partialorder %v1240, 0.0
    %vm1247 = vcmp.gt.f32.partialorder %v1242, 0.0
    %v1248 = vmin.f32 %v1234, 0.0
    %v1249 = vmin.f32 %v1236, 0.0
    %v1250 = vmin.f32 %v1240, 0.0
    %v1251 = vmin.f32 %v1242, 0.0
    %v1252 = vmul.f32 %v1248, 1.442695
    %v1253 = vpow.pop %v1252
    %v1254 = vmul.f32 %v1249, 1.442695
    %v1255 = vpow.pop %v1254
    %v1256 = vmul.f32 %v1250, 1.442695
    %v1257 = vpow.pop %v1256
    %v1258 = vmul.f32 %v1251, 1.442695
    %v1259 = vpow.pop %v1258
    %v1260 = vsub.f32 %v1253, 1.0
    %v1261 = vsub.f32 %v1255, 1.0
    %v1262 = vsub.f32 %v1257, 1.0
    %v1263 = vsub.f32 %v1259, 1.0
    %v1264 = vsel %vm1244, %v1234, %v1260
    %v1265 = vsel %vm1245, %v1236, %v1261
    %v1266 = vsel %vm1246, %v1240, %v1262
    %v1267 = vsel %vm1247, %v1242, %v1263
    %v1268 = vadd.f32 %v1264, %v1266
    %v1269 = vrot.slane %v1268, 4
    %v1270 = vadd.f32 %v1268, %v1269
    %v1271 = vrot.slane %v1270, 2
    %v1272 = vadd.f32 %v1270, %v1271
    %v1273 = vrot.slane %v1272, 1
    %v1274 = vadd.f32 %v1272, %v1273
    %v1275 = vadd.f32 %v1265, %v1267
    %v1276 = vrot.slane %v1275, 4
    %v1277 = vadd.f32 %v1275, %v1276
    %v1278 = vrot.slane %v1277, 2
    %v1279 = vadd.f32 %v1277, %v1278
    %v1280 = vrot.slane %v1279, 1
    %v1281 = vadd.f32 %v1279, %v1280
    %v1282 = vrcp.pop 16.0
    %v1283 = vmul.f32 %v1274, %v1282
    %v1284 = vmul.f32 %v1281, %v1282
    %v1285 = vsub.f32 %v1264, %v1283
    %v1286 = vsub.f32 %v1265, %v1284
    %v1287 = vsub.f32 %v1266, %v1283
    %v1288 = vsub.f32 %v1267, %v1284
    %v1289 = vmul.f32 %v1285, %v1285
    %v1290 = vmul.f32 %v1286, %v1286
    %v1291 = vmul.f32 %v1287, %v1287
    %v1292 = vmul.f32 %v1288, %v1288
    %v1293 = vadd.f32 %v1289, %v1291
    %v1294 = vrot.slane %v1293, 4
    %v1295 = vadd.f32 %v1293, %v1294
    %v1296 = vrot.slane %v1295, 2
    %v1297 = vadd.f32 %v1295, %v1296
    %v1298 = vrot.slane %v1297, 1
    %v1299 = vadd.f32 %v1297, %v1298
    %v1300 = vadd.f32 %v1290, %v1292
    %v1301 = vrot.slane %v1300, 4
    %v1302 = vadd.f32 %v1300, %v1301
    %v1303 = vrot.slane %v1302, 2
    %v1304 = vadd.f32 %v1302, %v1303
    %v1305 = vrot.slane %v1304, 1
    %v1306 = vadd.f32 %v1304, %v1305
    %v1307 = vmul.f32 %v1299, %v1282
    %v1308 = vmul.f32 %v1306, %v1282
    %v1309 = vadd.f32 %v1307, 1e-05
    %v1310 = vadd.f32 %v1308, 1e-05
    %v1311 = vrsqrt.pop %v1309
    %v1312 = vrsqrt.pop %v1310
    %v1313 = vmul.f32 %v1285, %v1311
    %v1314 = vmul.f32 %v1286, %v1312
    %v1315 = vmul.f32 %v1287, %v1311
    %v1316 = vmul.f32 %v1288, %v1312
    %v1317 = vld [vmem:[%s1 + $0xb0] sm:$0x7]
    %v1318 = vld [vmem:[%s2] sm:$0x7]
    %1320 = vset.pattern.permute.xlu0 5
    %1321 = vperm.xlu0 %1320, %v1318
    %v1322 = vpop.permute.xlu0 %1321
    %vm1324 = vcmask 130048
    %v1326 = vsel %vm1324, %v1317, 0
    %1328 = vmatprep.subr.mxu0 %v1314
    %1329 = vmatpush1.msra.mxu0 %v1313
    %1330 = vmatprep.subr.mxu0 %v1316
    %1331 = vmatpush1.msra.mxu0 %v1315
    %1332 = vmatprep.subr.mxu0 0.0
    %1333 = vmatpush1.msra.mxu0 0.0
    %1334 = vmatprep.subr.mxu0 0.0
    %1335 = vmatpush1.msra.mxu0 0.0
    %1336 = vmatprep.subr.mxu0 0.0
    %1337 = vmatpush1.msra.mxu0 0.0
    %1338 = vmatprep.subr.mxu0 0.0
    %1339 = vmatpush1.msra.mxu0 0.0
    %1340 = vmatprep.subr.mxu0 0.0
    %1341 = vmatpush1.msra.mxu0 0.0
    %1342 = vmatprep.subr.mxu0 0.0
    %1343 = vmatpush1.msra.mxu0 0.0
    %1344 = vmatprep.subr.mxu0 0.0
    %1345 = vmatpush1.msra.mxu0 0.0
    %1346 = vmatprep.subr.mxu0 0.0
    %1347 = vmatpush1.msra.mxu0 0.0
    %1348 = vmatprep.subr.mxu0 0.0
    %1349 = vmatpush1.msra.mxu0 0.0
    %1350 = vmatprep.subr.mxu0 0.0
    %1351 = vmatpush1.msra.mxu0 0.0
    %1352 = vmatprep.subr.mxu0 0.0
    %1353 = vmatpush1.msra.mxu0 0.0
    %1354 = vmatprep.subr.mxu0 0.0
    %1355 = vmatpush1.msra.mxu0 0.0
    %1356 = vmatprep.subr.mxu0 0.0
    %1357 = vmatpush1.msra.mxu0 0.0
    %1358 = vmatprep.subr.mxu0 0.0
    %1359 = vmatpush1.msra.mxu0 0.0
    %1360 = vmatprep.subr.mxu0 0.0
    %1361 = vmatpush1.msra.mxu0 0.0
    %1362 = vmatprep.subr.mxu0 0.0
    %1363 = vmatpush1.msra.mxu0 0.0
    %1364 = vmatprep.subr.mxu0 0.0
    %1365 = vmatpush1.msra.mxu0 0.0
    %1366 = vmatprep.subr.mxu0 0.0
    %1367 = vmatpush1.msra.mxu0 0.0
    %1368 = vmatprep.subr.mxu0 0.0
    %1369 = vmatpush1.msra.mxu0 0.0
    %1370 = vmatprep.subr.mxu0 0.0
    %1371 = vmatpush1.msra.mxu0 0.0
    %1372 = vmatprep.subr.mxu0 0.0
    %1373 = vmatpush1.msra.mxu0 0.0
    %1374 = vmatprep.subr.mxu0 0.0
    %1375 = vmatpush1.msra.mxu0 0.0
    %1376 = vmatprep.subr.mxu0 0.0
    %1377 = vmatpush1.msra.mxu0 0.0
    %1378 = vmatprep.subr.mxu0 0.0
    %1379 = vmatpush1.msra.mxu0 0.0
    %1380 = vmatprep.subr.mxu0 0.0
    %1381 = vmatpush1.msra.mxu0 0.0
    %1382 = vmatprep.subr.mxu0 0.0
    %1383 = vmatpush1.msra.mxu0 0.0
    %1384 = vmatprep.subr.mxu0 0.0
    %1385 = vmatpush1.msra.mxu0 0.0
    %1386 = vmatprep.subr.mxu0 0.0
    %1387 = vmatpush1.msra.mxu0 0.0
    %1388 = vmatprep.subr.mxu0 0.0
    %1389 = vmatpush1.msra.mxu0 0.0
    %1390 = vmatprep.subr.mxu0 0.0
    %1391 = vmatpush1.msra.mxu0 0.0
    %1392 = vmatprep.mubr.f32.mxu0 0.0
    %1393 = vmatmul.mubr.f32.gmra.mrb[0].mxu0 %v1326
    %v1394 = vpop.f32.mrb[0].mxu0
    %v1395 = vadd.f32 %v1322, %v1394
    %v1396 = vpop.f32.mrb[0].mxu0
    %v1397 = vadd.f32 %v1322, %v1396
    %1398 = vdwg.mxu0
    %v1401 = vcombine.low %v1395, %v1397
    %1403 = vst [vmem:[#allocation2] sm:$0x77] %v1401
    // Predicated region
    $region14: #{_net_forward_impl.1} parent=1 // pred_check
      _
    $region15: #{_net_forward_impl.1} parent=1 // pred_check_branch
      %1405 = sbr.rel (0) target = $region17
    $region16: #{_net_forward_impl.1} parent=1 // pred_region
      %s1407 = ssub.s32 128, 128
      %1408 = vsyncadd [#allocation3], %s1407
      %s1410 = sshll.u32 [#allocation2], 4
      %s1411 = int_to_ptr.vmem [resolvable:$true] %s1410
      %1413 = dma.vmem_to_hbm [thread:$0]  %s1411, 128, %s3, [#allocation3]
    $region17: #{_net_forward_impl.1} parent=1 // pred_fallthru
      _
    // Predicated region
    $region18: #{_net_forward_impl.1} parent=1 // pred_check
      _
    $region19: #{_net_forward_impl.1} parent=1 // pred_check_branch
      %1415 = sbr.rel (0) target = $region21
    $region20: #{_net_forward_impl.1} parent=1 // pred_region
      %1416 = dma.done [#allocation3], 128
    $region21: #{_net_forward_impl.1} parent=1 // pred_fallthru
      _
    %1417 = vsyncpa [#allocation3], 1

</llo_original>
